<compile_context>
chip_gen: v7x
topology: tpu7x:2x2x1
jax: 0.10.0
libtpu: 0.0.40
codegen_flags: <defaults>
</compile_context>

<pallas_src>
import jax
import jax.numpy as jnp
from jax import lax
from jax.experimental import pallas as pl
from jax.experimental.pallas import tpu as pltpu

D_MODEL = 256
D_FF = 512
LN_EPS = 1e-5
MAX_TILE_ROWS = 1024  # per-tile row cap: working set ~8-12 MiB, inside scoped VMEM


def _round_up(n, m):
    return (n + m - 1) // m * m


def _layernorm(x, gamma, beta):
    # One-pass statistics: sum(x) and sum(x*x) are independent cross-lane
    # (XLU) reductions that can overlap, and one 256-wide VPU subtract per row
    # is removed vs. the two-pass form. max(var, 0) guards f32 cancellation
    # (and padded all-zero rows stay finite via +eps).
    mu = jnp.mean(x, axis=-1, keepdims=True)
    var = jnp.maximum(jnp.mean(x * x, axis=-1, keepdims=True) - mu * mu, 0.0)
    return (x - mu) * lax.rsqrt(var + LN_EPS) * gamma + beta


def complexnet_kernel(
    x_ref,
    w1_ref, b1_ref,
    w2_ref, b2_ref,
    wa_ref, ba_ref,
    g1_ref, be1_ref,
    wl1_ref, bl1_ref,
    wl2_ref, bl2_ref,
    g2_ref, be2_ref,
    w3_ref, b3_ref,
    out_ref,
):
    f32 = jnp.float32
    mm = w1_ref.dtype  # matmul operand dtype (bf16 by default, f32 fallback)

    # layer1 / layer2: Linear + ReLU (Dropout is identity at inference).
    # One cast per matmul operand; accumulate / bias / residual / LN in f32.
    # NOTE: K = d_in = 128 for layer1 is left unpadded on purpose (see header).
    x = x_ref[...].astype(mm)
    h = jnp.maximum(
        jnp.dot(x, w1_ref[...], preferred_element_type=f32) + b1_ref[...], 0.0)
    h = jnp.maximum(
        jnp.dot(h.astype(mm), w2_ref[...], preferred_element_type=f32)
        + b2_ref[...], 0.0)

    # seq-len-1 self-attention: softmax over one key == 1, Q/K projections drop
    # out, so the block is exactly out_proj(V). Wv@Wo and bv@Wo+bo were folded
    # once at prepare time -> a single 256x256 matmul here.
    attn = (jnp.dot(h.astype(mm), wa_ref[...], preferred_element_type=f32)
            + ba_ref[...])
    t1 = _layernorm(h + attn, g1_ref[...], be1_ref[...])

    # transformer feed-forward block
    ff = jnp.maximum(
        jnp.dot(t1.astype(mm), wl1_ref[...], preferred_element_type=f32)
        + bl1_ref[...], 0.0)
    ff = (jnp.dot(ff.astype(mm), wl2_ref[...], preferred_element_type=f32)
          + bl2_ref[...])
    t2 = _layernorm(t1 + ff, g2_ref[...], be2_ref[...])

    # layer3 (output features pre-padded to a lane-dense multiple of 128 so the
    # store stays an unmasked vst).
    out_ref[...] = (
        jnp.dot(t2.astype(mm), w3_ref[...], preferred_element_type=f32)
        + b3_ref[...]
    ).astype(out_ref.dtype)


def prepare_params(params, *, matmul_dtype=jnp.bfloat16):
    """One-time parameter preparation (hoisted out of the per-call path).

    Folds the seq-len-1 attention (Wv@Wo, bv@Wo+bo), casts matmul weights to
    the MXU operand dtype, keeps biases/LN params in f32, and pads layer3 to a
    lane-dense output width. Call once at setup; every forward then passes the
    already-converted weights straight into pallas_call (no per-call
    f32->bf16 HBM round trip and no per-call fold matmul).
    """
    mm = jnp.dtype(matmul_dtype)
    f32 = jnp.float32
    d_out = params["w3"].shape[1]
    d_out_p = _round_up(max(d_out, 128), 128)

    # Attention fold (exact algebra; single bf16 quantization of the product).
    w_attn = (params["wv"] @ params["wo"]).astype(mm)
    b_attn = (params["bv"] @ params["wo"] + params["bo"]).astype(f32)

    w3 = params["w3"].astype(mm)
    b3 = params["b3"].astype(f32)
    if d_out_p != d_out:
        w3 = jnp.pad(w3, ((0, 0), (0, d_out_p - d_out)))
        b3 = jnp.pad(b3, ((0, 0), (0, d_out_p - d_out)))

    args = (
        params["w1"].astype(mm), params["b1"].astype(f32),
        params["w2"].astype(mm), params["b2"].astype(f32),
        w_attn, b_attn,
        params["g1"].astype(f32), params["be1"].astype(f32),
        params["wl1"].astype(mm), params["bl1"].astype(f32),
        params["wl2"].astype(mm), params["bl2"].astype(f32),
        params["g2"].astype(f32), params["be2"].astype(f32),
        w3, b3,
    )
    return {"args": args, "d_out": d_out, "d_out_p": d_out_p,
            "matmul_dtype": mm}


def _pick_block_b(B, row_align):
    """Batch-tile selection.

    <=256 rows: one full-batch tile (grid=(1,)) -- small-batch latency path.
    Otherwise: an even number (>=2) of grid steps so both v7x TensorCores get
    work under dimension_semantics=('parallel',), with tiles capped at
    MAX_TILE_ROWS to amortize per-grid-step overhead on v5e/v6e while staying
    well inside the scoped-VMEM default on every generation.
    """
    if B <= 256:
        return _round_up(B, row_align)
    n_steps = 2 * pl.cdiv(B, 2 * MAX_TILE_ROWS)  # even, tile <= MAX_TILE_ROWS
    return _round_up(pl.cdiv(B, n_steps), row_align)


def complexnet_forward(x, prepared, *, block_b=None, out_dtype=jnp.float32):
    """Fused ComplexNet forward pass.

    `prepared` comes from prepare_params() (weights pre-cast / folded / padded).
    x may be f32 or bf16; it is cast per matmul operand inside the kernel, so
    callers that already hold bf16 activations can pass them directly (halves
    the input DMA). out_dtype=bf16 halves the output writeback if downstream
    tolerates it (most useful on v5e's single vector-store slot).
    """
    B, d_in = x.shape
    args = prepared["args"]
    d_out, d_out_p = prepared["d_out"], prepared["d_out_p"]
    mm = prepared["matmul_dtype"]

    # bf16 packs (16,128) per vreg -> keep row tiles a multiple of 16.
    row_align = 16 if mm == jnp.bfloat16 else 8
    if block_b is None:
        block_b = _pick_block_b(B, row_align)
    block_b = _round_up(block_b, row_align)
    B_p = _round_up(B, block_b)
    x_p = jnp.pad(x, ((0, B_p - B), (0, 0))) if B_p != B else x
    # NOTE: if a caller forces block_b > 2048 (v7x), raise vmem_limit_bytes via
    # pltpu.CompilerParams; at the default <=1024-row tiles it is not needed.

    # Grid-invariant (constant index_map) weight/bias blocks: fetched once and,
    # with Buffered(1), held as a single VMEM copy (no double-buffer swap).
    def const_spec(a):
        return pl.BlockSpec(a.shape, lambda i: (0, 0),
                            pipeline_mode=pl.Buffered(1))

    in_specs = [pl.BlockSpec((block_b, d_in), lambda i: (i, 0))]
    in_specs += [const_spec(a) for a in args]

    out = pl.pallas_call(
        complexnet_kernel,
        out_shape=jax.ShapeDtypeStruct((B_p, d_out_p), out_dtype),
        grid_spec=pltpu.PrefetchScalarGridSpec(
            num_scalar_prefetch=0,
            grid=(B_p // block_b,),
            in_specs=in_specs,
            out_specs=pl.BlockSpec((block_b, d_out_p), lambda i: (i, 0)),
        ),
        compiler_params=pltpu.CompilerParams(
            dimension_semantics=("parallel",)),
    )(x_p, *args)

    return out[:B, :d_out]


def init_params(key, input_size, output_size):
    """Deterministic PyTorch-style (uniform +-1/sqrt(fan_in)) init.
    Linear weights are stored transposed: (in_features, out_features)."""
    def linear(k, fan_in, fan_out):
        kw, kb = jax.random.split(k)
        bound = 1.0 / jnp.sqrt(fan_in)
        w = jax.random.uniform(kw, (fan_in, fan_out), jnp.float32, -bound, bound)
        b = jax.random.uniform(kb, (1, fan_out), jnp.float32, -bound, bound)
        return w, b

    keys = jax.random.split(key, 8)
    p = {}
    p["w1"], p["b1"] = linear(keys[0], input_size, D_MODEL)
    p["w2"], p["b2"] = linear(keys[1], D_MODEL, D_MODEL)
    # MultiheadAttention in_proj V slice and out_proj
    p["wv"], p["bv"] = linear(keys[2], D_MODEL, D_MODEL)
    p["wo"], p["bo"] = linear(keys[3], D_MODEL, D_MODEL)
    # LayerNorms
    p["g1"] = jnp.ones((1, D_MODEL), jnp.float32)
    p["be1"] = jnp.zeros((1, D_MODEL), jnp.float32)
    p["g2"] = jnp.ones((1, D_MODEL), jnp.float32)
    p["be2"] = jnp.zeros((1, D_MODEL), jnp.float32)
    # feed-forward
    p["wl1"], p["bl1"] = linear(keys[4], D_MODEL, D_FF)
    p["wl2"], p["bl2"] = linear(keys[5], D_FF, D_MODEL)
    # layer3
    p["w3"], p["b3"] = linear(keys[6], D_MODEL, output_size)
    return p


def reference_forward(x, p):
    """Pure-JAX f32 reference with the original (unfolded) module math."""
    h = jnp.maximum(x @ p["w1"] + p["b1"], 0.0)
    h = jnp.maximum(h @ p["w2"] + p["b2"], 0.0)
    attn = (h @ p["wv"] + p["bv"]) @ p["wo"] + p["bo"]
    t1 = _layernorm(h + attn, p["g1"], p["be1"])
    ff = jnp.maximum(t1 @ p["wl1"] + p["bl1"], 0.0) @ p["wl2"] + p["bl2"]
    t2 = _layernorm(t1 + ff, p["g2"], p["be2"])
    return t2 @ p["w3"] + p["b3"]


if __name__ == "__main__":
    INPUT_SIZE = 128
    OUTPUT_SIZE = 128
    BATCH = 16

    key = jax.random.PRNGKey(0)
    k_params, k_x = jax.random.split(key)
    params = init_params(k_params, INPUT_SIZE, OUTPUT_SIZE)
    x = jax.random.normal(k_x, (BATCH, INPUT_SIZE), jnp.float32)

    ref = jax.block_until_ready(reference_forward(x, params))

    # f32 matmul path: validates the fusion + attention folding tightly.
    prep_f32 = prepare_params(params, matmul_dtype=jnp.float32)
    out_f32 = jax.block_until_ready(complexnet_forward(x, prep_f32))
    assert out_f32.shape == (BATCH, OUTPUT_SIZE)
    err_f32 = float(jnp.max(jnp.abs(out_f32 - ref)))
    assert err_f32 < 2e-2, f"f32 kernel mismatch vs reference: {err_f32}"

    # bf16 matmul path (perf default for v6e/v7x): loose check vs f32 reference
    # (bf16 operand quantization, f32 accumulation; Wv@Wo folded+quantized once).
    prep_bf16 = prepare_params(params)
    out_bf16 = jax.block_until_ready(complexnet_forward(x, prep_bf16))
    assert out_bf16.shape == (BATCH, OUTPUT_SIZE)
    err_bf16 = float(jnp.max(jnp.abs(out_bf16 - ref)))
    assert err_bf16 < 1e-1, f"bf16 kernel mismatch vs reference: {err_bf16}"

    print("KERNEL_OK")
</pallas_src>

<mosaic_0001>
module attributes {stable_mosaic.version = 11 : i64} {
  func.func @complexnet_kernel(%arg0: i32, %arg1: memref<16x128xf32, #tpu.memory_space<vmem>>, %arg2: memref<128x256xf32, #tpu.memory_space<vmem>>, %arg3: memref<1x256xf32, #tpu.memory_space<vmem>>, %arg4: memref<256x256xf32, #tpu.memory_space<vmem>>, %arg5: memref<1x256xf32, #tpu.memory_space<vmem>>, %arg6: memref<256x256xf32, #tpu.memory_space<vmem>>, %arg7: memref<1x256xf32, #tpu.memory_space<vmem>>, %arg8: memref<1x256xf32, #tpu.memory_space<vmem>>, %arg9: memref<1x256xf32, #tpu.memory_space<vmem>>, %arg10: memref<256x512xf32, #tpu.memory_space<vmem>>, %arg11: memref<1x512xf32, #tpu.memory_space<vmem>>, %arg12: memref<512x256xf32, #tpu.memory_space<vmem>>, %arg13: memref<1x256xf32, #tpu.memory_space<vmem>>, %arg14: memref<1x256xf32, #tpu.memory_space<vmem>>, %arg15: memref<1x256xf32, #tpu.memory_space<vmem>>, %arg16: memref<256x128xf32, #tpu.memory_space<vmem>>, %arg17: memref<1x128xf32, #tpu.memory_space<vmem>>, %arg18: memref<16x128xf32, #tpu.memory_space<vmem>>) attributes {dimension_semantics = [#tpu.dimension_semantics<parallel>], iteration_bounds = array<i64: 1>, scalar_prefetch = 0 : i64, scratch_operands = 0 : i64, tpu.core_type = #tpu.core_type<tc>, window_params = [{transform_indices = @transform_0, window_bounds = array<i64: 16, 128>}, {pipeline_mode = #tpu.pipeline_mode<synchronous>, transform_indices = @transform_1, window_bounds = array<i64: 128, 256>}, {pipeline_mode = #tpu.pipeline_mode<synchronous>, transform_indices = @transform_2, window_bounds = array<i64: 1, 256>}, {pipeline_mode = #tpu.pipeline_mode<synchronous>, transform_indices = @transform_3, window_bounds = array<i64: 256, 256>}, {pipeline_mode = #tpu.pipeline_mode<synchronous>, transform_indices = @transform_4, window_bounds = array<i64: 1, 256>}, {pipeline_mode = #tpu.pipeline_mode<synchronous>, transform_indices = @transform_5, window_bounds = array<i64: 256, 256>}, {pipeline_mode = #tpu.pipeline_mode<synchronous>, transform_indices = @transform_6, window_bounds = array<i64: 1, 256>}, {pipeline_mode = #tpu.pipeline_mode<synchronous>, transform_indices = @transform_7, window_bounds = array<i64: 1, 256>}, {pipeline_mode = #tpu.pipeline_mode<synchronous>, transform_indices = @transform_8, window_bounds = array<i64: 1, 256>}, {pipeline_mode = #tpu.pipeline_mode<synchronous>, transform_indices = @transform_9, window_bounds = array<i64: 256, 512>}, {pipeline_mode = #tpu.pipeline_mode<synchronous>, transform_indices = @transform_10, window_bounds = array<i64: 1, 512>}, {pipeline_mode = #tpu.pipeline_mode<synchronous>, transform_indices = @transform_11, window_bounds = array<i64: 512, 256>}, {pipeline_mode = #tpu.pipeline_mode<synchronous>, transform_indices = @transform_12, window_bounds = array<i64: 1, 256>}, {pipeline_mode = #tpu.pipeline_mode<synchronous>, transform_indices = @transform_13, window_bounds = array<i64: 1, 256>}, {pipeline_mode = #tpu.pipeline_mode<synchronous>, transform_indices = @transform_14, window_bounds = array<i64: 1, 256>}, {pipeline_mode = #tpu.pipeline_mode<synchronous>, transform_indices = @transform_15, window_bounds = array<i64: 256, 128>}, {pipeline_mode = #tpu.pipeline_mode<synchronous>, transform_indices = @transform_16, window_bounds = array<i64: 1, 128>}, {transform_indices = @transform_17, window_bounds = array<i64: 16, 128>}]} {
    %c0 = arith.constant 0 : index
    %c0_0 = arith.constant 0 : index
    %0 = vector.load %arg1[%c0, %c0_0] : memref<16x128xf32, #tpu.memory_space<vmem>>, vector<16x128xf32>
    %c0_1 = arith.constant 0 : index
    %c0_2 = arith.constant 0 : index
    %1 = vector.load %arg2[%c0_1, %c0_2] : memref<128x256xf32, #tpu.memory_space<vmem>>, vector<128x256xf32>
    %cst = arith.constant dense<0.000000e+00> : vector<16x256xf32>
    %2 = tpu.matmul %0, %1, %cst {dimension_numbers = #tpu.dot_dimension_numbers<[1], [0], [0], [1], [0, 0, 1, 1], [], []>} : vector<16x128xf32>, vector<128x256xf32>, vector<16x256xf32> -> vector<16x256xf32>
    %c0_3 = arith.constant 0 : index
    %c0_4 = arith.constant 0 : index
    %3 = vector.load %arg3[%c0_3, %c0_4] : memref<1x256xf32, #tpu.memory_space<vmem>>, vector<1x256xf32>
    %4 = vector.broadcast %3 : vector<1x256xf32> to vector<16x256xf32>
    %5 = arith.addf %2, %4 : vector<16x256xf32>
    %cst_5 = arith.constant 0.000000e+00 : f32
    %6 = vector.broadcast %cst_5 : f32 to vector<16x256xf32>
    %7 = arith.maximumf %5, %6 : vector<16x256xf32>
    %c0_6 = arith.constant 0 : index
    %c0_7 = arith.constant 0 : index
    %8 = vector.load %arg4[%c0_6, %c0_7] : memref<256x256xf32, #tpu.memory_space<vmem>>, vector<256x256xf32>
    %cst_8 = arith.constant dense<0.000000e+00> : vector<16x256xf32>
    %9 = tpu.matmul %7, %8, %cst_8 {dimension_numbers = #tpu.dot_dimension_numbers<[1], [0], [0], [1], [0, 0, 1, 1], [], []>} : vector<16x256xf32>, vector<256x256xf32>, vector<16x256xf32> -> vector<16x256xf32>
    %c0_9 = arith.constant 0 : index
    %c0_10 = arith.constant 0 : index
    %10 = vector.load %arg5[%c0_9, %c0_10] : memref<1x256xf32, #tpu.memory_space<vmem>>, vector<1x256xf32>
    %11 = vector.broadcast %10 : vector<1x256xf32> to vector<16x256xf32>
    %12 = arith.addf %9, %11 : vector<16x256xf32>
    %cst_11 = arith.constant 0.000000e+00 : f32
    %13 = vector.broadcast %cst_11 : f32 to vector<16x256xf32>
    %14 = arith.maximumf %12, %13 : vector<16x256xf32>
    %c0_12 = arith.constant 0 : index
    %c0_13 = arith.constant 0 : index
    %15 = vector.load %arg6[%c0_12, %c0_13] : memref<256x256xf32, #tpu.memory_space<vmem>>, vector<256x256xf32>
    %cst_14 = arith.constant dense<0.000000e+00> : vector<16x256xf32>
    %16 = tpu.matmul %14, %15, %cst_14 {dimension_numbers = #tpu.dot_dimension_numbers<[1], [0], [0], [1], [0, 0, 1, 1], [], []>} : vector<16x256xf32>, vector<256x256xf32>, vector<16x256xf32> -> vector<16x256xf32>
    %c0_15 = arith.constant 0 : index
    %c0_16 = arith.constant 0 : index
    %17 = vector.load %arg7[%c0_15, %c0_16] : memref<1x256xf32, #tpu.memory_space<vmem>>, vector<1x256xf32>
    %18 = vector.broadcast %17 : vector<1x256xf32> to vector<16x256xf32>
    %19 = arith.addf %16, %18 : vector<16x256xf32>
    %20 = arith.addf %14, %19 : vector<16x256xf32>
    %c0_17 = arith.constant 0 : index
    %c0_18 = arith.constant 0 : index
    %21 = vector.load %arg8[%c0_17, %c0_18] : memref<1x256xf32, #tpu.memory_space<vmem>>, vector<1x256xf32>
    %c0_19 = arith.constant 0 : index
    %c0_20 = arith.constant 0 : index
    %22 = vector.load %arg9[%c0_19, %c0_20] : memref<1x256xf32, #tpu.memory_space<vmem>>, vector<1x256xf32>
    %cst_21 = arith.constant dense<0.000000e+00> : vector<16xf32>
    %23 = vector.multi_reduction <add>, %20, %cst_21 [1] : vector<16x256xf32> to vector<16xf32>
    %24 = vector.shape_cast %23 : vector<16xf32> to vector<16x1xf32>
    %cst_22 = arith.constant 2.560000e+02 : f32
    %25 = vector.broadcast %cst_22 : f32 to vector<16x1xf32>
    %26 = arith.divf %24, %25 : vector<16x1xf32>
    %27 = arith.mulf %20, %20 : vector<16x256xf32>
    %cst_23 = arith.constant dense<0.000000e+00> : vector<16xf32>
    %28 = vector.multi_reduction <add>, %27, %cst_23 [1] : vector<16x256xf32> to vector<16xf32>
    %29 = vector.shape_cast %28 : vector<16xf32> to vector<16x1xf32>
    %cst_24 = arith.constant 2.560000e+02 : f32
    %30 = vector.broadcast %cst_24 : f32 to vector<16x1xf32>
    %31 = arith.divf %29, %30 : vector<16x1xf32>
    %32 = arith.mulf %26, %26 : vector<16x1xf32>
    %33 = arith.subf %31, %32 : vector<16x1xf32>
    %cst_25 = arith.constant 0.000000e+00 : f32
    %34 = vector.broadcast %cst_25 : f32 to vector<16x1xf32>
    %35 = arith.maximumf %33, %34 : vector<16x1xf32>
    %36 = vector.broadcast %26 : vector<16x1xf32> to vector<16x256xf32>
    %37 = arith.subf %20, %36 : vector<16x256xf32>
    %cst_26 = arith.constant 9.99999974E-6 : f32
    %38 = vector.broadcast %cst_26 : f32 to vector<16x1xf32>
    %39 = arith.addf %35, %38 : vector<16x1xf32>
    %40 = math.rsqrt %39 : vector<16x1xf32>
    %41 = vector.broadcast %40 : vector<16x1xf32> to vector<16x256xf32>
    %42 = arith.mulf %37, %41 : vector<16x256xf32>
    %43 = vector.broadcast %21 : vector<1x256xf32> to vector<16x256xf32>
    %44 = arith.mulf %42, %43 : vector<16x256xf32>
    %45 = vector.broadcast %22 : vector<1x256xf32> to vector<16x256xf32>
    %46 = arith.addf %44, %45 : vector<16x256xf32>
    %c0_27 = arith.constant 0 : index
    %c0_28 = arith.constant 0 : index
    %47 = vector.load %arg10[%c0_27, %c0_28] : memref<256x512xf32, #tpu.memory_space<vmem>>, vector<256x512xf32>
    %cst_29 = arith.constant dense<0.000000e+00> : vector<16x512xf32>
    %48 = tpu.matmul %46, %47, %cst_29 {dimension_numbers = #tpu.dot_dimension_numbers<[1], [0], [0], [1], [0, 0, 1, 1], [], []>} : vector<16x256xf32>, vector<256x512xf32>, vector<16x512xf32> -> vector<16x512xf32>
    %c0_30 = arith.constant 0 : index
    %c0_31 = arith.constant 0 : index
    %49 = vector.load %arg11[%c0_30, %c0_31] : memref<1x512xf32, #tpu.memory_space<vmem>>, vector<1x512xf32>
    %50 = vector.broadcast %49 : vector<1x512xf32> to vector<16x512xf32>
    %51 = arith.addf %48, %50 : vector<16x512xf32>
    %cst_32 = arith.constant 0.000000e+00 : f32
    %52 = vector.broadcast %cst_32 : f32 to vector<16x512xf32>
    %53 = arith.maximumf %51, %52 : vector<16x512xf32>
    %c0_33 = arith.constant 0 : index
    %c0_34 = arith.constant 0 : index
    %54 = vector.load %arg12[%c0_33, %c0_34] : memref<512x256xf32, #tpu.memory_space<vmem>>, vector<512x256xf32>
    %cst_35 = arith.constant dense<0.000000e+00> : vector<16x256xf32>
    %55 = tpu.matmul %53, %54, %cst_35 {dimension_numbers = #tpu.dot_dimension_numbers<[1], [0], [0], [1], [0, 0, 1, 1], [], []>} : vector<16x512xf32>, vector<512x256xf32>, vector<16x256xf32> -> vector<16x256xf32>
    %c0_36 = arith.constant 0 : index
    %c0_37 = arith.constant 0 : index
    %56 = vector.load %arg13[%c0_36, %c0_37] : memref<1x256xf32, #tpu.memory_space<vmem>>, vector<1x256xf32>
    %57 = vector.broadcast %56 : vector<1x256xf32> to vector<16x256xf32>
    %58 = arith.addf %55, %57 : vector<16x256xf32>
    %59 = arith.addf %46, %58 : vector<16x256xf32>
    %c0_38 = arith.constant 0 : index
    %c0_39 = arith.constant 0 : index
    %60 = vector.load %arg14[%c0_38, %c0_39] : memref<1x256xf32, #tpu.memory_space<vmem>>, vector<1x256xf32>
    %c0_40 = arith.constant 0 : index
    %c0_41 = arith.constant 0 : index
    %61 = vector.load %arg15[%c0_40, %c0_41] : memref<1x256xf32, #tpu.memory_space<vmem>>, vector<1x256xf32>
    %cst_42 = arith.constant dense<0.000000e+00> : vector<16xf32>
    %62 = vector.multi_reduction <add>, %59, %cst_42 [1] : vector<16x256xf32> to vector<16xf32>
    %63 = vector.shape_cast %62 : vector<16xf32> to vector<16x1xf32>
    %cst_43 = arith.constant 2.560000e+02 : f32
    %64 = vector.broadcast %cst_43 : f32 to vector<16x1xf32>
    %65 = arith.divf %63, %64 : vector<16x1xf32>
    %66 = arith.mulf %59, %59 : vector<16x256xf32>
    %cst_44 = arith.constant dense<0.000000e+00> : vector<16xf32>
    %67 = vector.multi_reduction <add>, %66, %cst_44 [1] : vector<16x256xf32> to vector<16xf32>
    %68 = vector.shape_cast %67 : vector<16xf32> to vector<16x1xf32>
    %cst_45 = arith.constant 2.560000e+02 : f32
    %69 = vector.broadcast %cst_45 : f32 to vector<16x1xf32>
    %70 = arith.divf %68, %69 : vector<16x1xf32>
    %71 = arith.mulf %65, %65 : vector<16x1xf32>
    %72 = arith.subf %70, %71 : vector<16x1xf32>
    %cst_46 = arith.constant 0.000000e+00 : f32
    %73 = vector.broadcast %cst_46 : f32 to vector<16x1xf32>
    %74 = arith.maximumf %72, %73 : vector<16x1xf32>
    %75 = vector.broadcast %65 : vector<16x1xf32> to vector<16x256xf32>
    %76 = arith.subf %59, %75 : vector<16x256xf32>
    %cst_47 = arith.constant 9.99999974E-6 : f32
    %77 = vector.broadcast %cst_47 : f32 to vector<16x1xf32>
    %78 = arith.addf %74, %77 : vector<16x1xf32>
    %79 = math.rsqrt %78 : vector<16x1xf32>
    %80 = vector.broadcast %79 : vector<16x1xf32> to vector<16x256xf32>
    %81 = arith.mulf %76, %80 : vector<16x256xf32>
    %82 = vector.broadcast %60 : vector<1x256xf32> to vector<16x256xf32>
    %83 = arith.mulf %81, %82 : vector<16x256xf32>
    %84 = vector.broadcast %61 : vector<1x256xf32> to vector<16x256xf32>
    %85 = arith.addf %83, %84 : vector<16x256xf32>
    %c0_48 = arith.constant 0 : index
    %c0_49 = arith.constant 0 : index
    %86 = vector.load %arg16[%c0_48, %c0_49] : memref<256x128xf32, #tpu.memory_space<vmem>>, vector<256x128xf32>
    %cst_50 = arith.constant dense<0.000000e+00> : vector<16x128xf32>
    %87 = tpu.matmul %85, %86, %cst_50 {dimension_numbers = #tpu.dot_dimension_numbers<[1], [0], [0], [1], [0, 0, 1, 1], [], []>} : vector<16x256xf32>, vector<256x128xf32>, vector<16x128xf32> -> vector<16x128xf32>
    %c0_51 = arith.constant 0 : index
    %c0_52 = arith.constant 0 : index
    %88 = vector.load %arg17[%c0_51, %c0_52] : memref<1x128xf32, #tpu.memory_space<vmem>>, vector<1x128xf32>
    %89 = vector.broadcast %88 : vector<1x128xf32> to vector<16x128xf32>
    %90 = arith.addf %87, %89 : vector<16x128xf32>
    %c0_53 = arith.constant 0 : index
    %c0_54 = arith.constant 0 : index
    %91 = vector.load %arg18[%c0_53, %c0_54] : memref<16x128xf32, #tpu.memory_space<vmem>>, vector<16x128xf32>
    tpu.vector_store %arg18[%c0_53, %c0_54], %90 {strides = array<i32>} : memref<16x128xf32, #tpu.memory_space<vmem>>, vector<16x128xf32>,
    return
  }
  func.func @transform_0(%arg0: i32) -> (i32, i32) {
    %c0_i32 = arith.constant 0 : i32
    %c0_i32_0 = arith.constant 0 : i32
    return %arg0, %c0_i32 : i32, i32
  }
  func.func @transform_1(%arg0: i32) -> (i32, i32) {
    %c0_i32 = arith.constant 0 : i32
    %c0_i32_0 = arith.constant 0 : i32
    %c0_i32_1 = arith.constant 0 : i32
    return %c0_i32, %c0_i32_0 : i32, i32
  }
  func.func @transform_2(%arg0: i32) -> (i32, i32) {
    %c0_i32 = arith.constant 0 : i32
    %c0_i32_0 = arith.constant 0 : i32
    %c0_i32_1 = arith.constant 0 : i32
    return %c0_i32, %c0_i32_0 : i32, i32
  }
  func.func @transform_3(%arg0: i32) -> (i32, i32) {
    %c0_i32 = arith.constant 0 : i32
    %c0_i32_0 = arith.constant 0 : i32
    %c0_i32_1 = arith.constant 0 : i32
    return %c0_i32, %c0_i32_0 : i32, i32
  }
  func.func @transform_4(%arg0: i32) -> (i32, i32) {
    %c0_i32 = arith.constant 0 : i32
    %c0_i32_0 = arith.constant 0 : i32
    %c0_i32_1 = arith.constant 0 : i32
    return %c0_i32, %c0_i32_0 : i32, i32
  }
  func.func @transform_5(%arg0: i32) -> (i32, i32) {
    %c0_i32 = arith.constant 0 : i32
    %c0_i32_0 = arith.constant 0 : i32
    %c0_i32_1 = arith.constant 0 : i32
    return %c0_i32, %c0_i32_0 : i32, i32
  }
  func.func @transform_6(%arg0: i32) -> (i32, i32) {
    %c0_i32 = arith.constant 0 : i32
    %c0_i32_0 = arith.constant 0 : i32
    %c0_i32_1 = arith.constant 0 : i32
    return %c0_i32, %c0_i32_0 : i32, i32
  }
  func.func @transform_7(%arg0: i32) -> (i32, i32) {
    %c0_i32 = arith.constant 0 : i32
    %c0_i32_0 = arith.constant 0 : i32
    %c0_i32_1 = arith.constant 0 : i32
    return %c0_i32, %c0_i32_0 : i32, i32
  }
  func.func @transform_8(%arg0: i32) -> (i32, i32) {
    %c0_i32 = arith.constant 0 : i32
    %c0_i32_0 = arith.constant 0 : i32
    %c0_i32_1 = arith.constant 0 : i32
    return %c0_i32, %c0_i32_0 : i32, i32
  }
  func.func @transform_9(%arg0: i32) -> (i32, i32) {
    %c0_i32 = arith.constant 0 : i32
    %c0_i32_0 = arith.constant 0 : i32
    %c0_i32_1 = arith.constant 0 : i32
    return %c0_i32, %c0_i32_0 : i32, i32
  }
  func.func @transform_10(%arg0: i32) -> (i32, i32) {
    %c0_i32 = arith.constant 0 : i32
    %c0_i32_0 = arith.constant 0 : i32
    %c0_i32_1 = arith.constant 0 : i32
    return %c0_i32, %c0_i32_0 : i32, i32
  }
  func.func @transform_11(%arg0: i32) -> (i32, i32) {
    %c0_i32 = arith.constant 0 : i32
    %c0_i32_0 = arith.constant 0 : i32
    %c0_i32_1 = arith.constant 0 : i32
    return %c0_i32, %c0_i32_0 : i32, i32
  }
  func.func @transform_12(%arg0: i32) -> (i32, i32) {
    %c0_i32 = arith.constant 0 : i32
    %c0_i32_0 = arith.constant 0 : i32
    %c0_i32_1 = arith.constant 0 : i32
    return %c0_i32, %c0_i32_0 : i32, i32
  }
  func.func @transform_13(%arg0: i32) -> (i32, i32) {
    %c0_i32 = arith.constant 0 : i32
    %c0_i32_0 = arith.constant 0 : i32
    %c0_i32_1 = arith.constant 0 : i32
    return %c0_i32, %c0_i32_0 : i32, i32
  }
  func.func @transform_14(%arg0: i32) -> (i32, i32) {
    %c0_i32 = arith.constant 0 : i32
    %c0_i32_0 = arith.constant 0 : i32
    %c0_i32_1 = arith.constant 0 : i32
    return %c0_i32, %c0_i32_0 : i32, i32
  }
  func.func @transform_15(%arg0: i32) -> (i32, i32) {
    %c0_i32 = arith.constant 0 : i32
    %c0_i32_0 = arith.constant 0 : i32
    %c0_i32_1 = arith.constant 0 : i32
    return %c0_i32, %c0_i32_0 : i32, i32
  }
  func.func @transform_16(%arg0: i32) -> (i32, i32) {
    %c0_i32 = arith.constant 0 : i32
    %c0_i32_0 = arith.constant 0 : i32
    %c0_i32_1 = arith.constant 0 : i32
    return %c0_i32, %c0_i32_0 : i32, i32
  }
  func.func @transform_17(%arg0: i32) -> (i32, i32) {
    %c0_i32 = arith.constant 0 : i32
    %c0_i32_0 = arith.constant 0 : i32
    return %arg0, %c0_i32 : i32, i32
  }
}

</mosaic_0001>

<llo_original>
// kernel: tpu_custom_call.1
$region0: #{tpu_custom_call.1}
  #allocation0 [shape = 'u32[]', space=smem, size = 0x4, offset = 0x4, fixed_abs, tag = 'smem constant byte address 0x4 - core index']
  #allocation1 [shape = 'u32[144,128]{1,0:T(1,128)}', space=vmem, size = 0x12000, scoped, tag = 'internal scratch']
  %s0 = inlined_call_operand.hbm [shape: f32[16,128], index: 0, kind: input, shape index: {}]
  %s1 = inlined_call_operand.hbm [shape: f32[128,256], index: 1, kind: input, shape index: {}]
  %s2 = inlined_call_operand.vmem [shape: f32[1,256], index: 2, kind: input, shape index: {}]
  %s3 = inlined_call_operand.hbm [shape: f32[256,256], index: 3, kind: input, shape index: {}]
  %s4 = inlined_call_operand.vmem [shape: f32[1,256], index: 4, kind: input, shape index: {}]
  %s5 = inlined_call_operand.hbm [shape: f32[256,256], index: 5, kind: input, shape index: {}]
  %s6 = inlined_call_operand.vmem [shape: f32[1,256], index: 6, kind: input, shape index: {}]
  %s7 = inlined_call_operand.vmem [shape: f32[1,256], index: 7, kind: input, shape index: {}]
  %s8 = inlined_call_operand.vmem [shape: f32[1,256], index: 8, kind: input, shape index: {}]
  %s9 = inlined_call_operand.hbm [shape: f32[256,512], index: 9, kind: input, shape index: {}]
  %s10 = inlined_call_operand.vmem [shape: f32[1,512], index: 10, kind: input, shape index: {}]
  %s11 = inlined_call_operand.hbm [shape: f32[512,256], index: 11, kind: input, shape index: {}]
  %s12 = inlined_call_operand.vmem [shape: f32[1,256], index: 12, kind: input, shape index: {}]
  %s13 = inlined_call_operand.vmem [shape: f32[1,256], index: 13, kind: input, shape index: {}]
  %s14 = inlined_call_operand.vmem [shape: f32[1,256], index: 14, kind: input, shape index: {}]
  %s15 = inlined_call_operand.hbm [shape: f32[256,128], index: 15, kind: input, shape index: {}]
  %s16 = inlined_call_operand.vmem [shape: f32[1,128], index: 16, kind: input, shape index: {}]
  %s17 = inlined_call_operand.hbm [shape: f32[16,128], index: 17, kind: output, shape index: {}]
  %s18 = sld [smem:[#allocation0]]
  $region106: #{tpu_custom_call.1} parent=0
    _
  %s20 = ssub.s32 1, %s18
  %s21 = scalar_select 0, %s20, %s18
  $region1: #{tpu_custom_call.1} parent=0
    #allocation2 [shape = 'u8[8192]{0}', space=vmem, size = 0x2000, scoped, tag = 'input window, operand 0, single buffered']
    #allocation3 [shape = 's32[1]{0}', space=sflag, size = 0x4, scoped, tag = 'scoped memory for tpu_custom_call.1']
    #allocation4 [shape = 's32[1]{0}', space=sflag, size = 0x4, scoped, tag = 'scoped memory for tpu_custom_call.1']
    #allocation5 [shape = 'u8[131072]{0}', space=vmem, size = 0x20000, scoped, tag = 'input window, operand 1, single buffered']
    #allocation6 [shape = 's32[1]{0}', space=sflag, size = 0x4, scoped, tag = 'scoped memory for tpu_custom_call.1']
    #allocation7 [shape = 'u8[262144]{0}', space=vmem, size = 0x40000, scoped, tag = 'input window, operand 3, single buffered']
    #allocation8 [shape = 'u8[262144]{0}', space=vmem, size = 0x40000, scoped, tag = 'input window, operand 5, single buffered']
    #allocation9 [shape = 's32[1]{0}', space=sflag, size = 0x4, scoped, tag = 'scoped memory for tpu_custom_call.1']
    #allocation10 [shape = 'u8[524288]{0}', space=vmem, size = 0x80000, scoped, tag = 'input window, operand 9, single buffered']
    #allocation11 [shape = 'u8[524288]{0}', space=vmem, size = 0x80000, scoped, tag = 'input window, operand 11, single buffered']
    #allocation12 [shape = 's32[1]{0}', space=sflag, size = 0x4, scoped, tag = 'scoped memory for tpu_custom_call.1']
    #allocation13 [shape = 'u8[131072]{0}', space=vmem, size = 0x20000, scoped, tag = 'input window, operand 15, single buffered']
    #allocation14 [shape = 'u8[8192]{0}', space=vmem, size = 0x2000, scoped, tag = 'output window, operand 0, single buffered']
    %22 = vsyncpa [#allocation3], 0
    %23 = vsyncpa [#allocation6], 0
    %24 = vsyncpa [#allocation9], 0
    %25 = vsyncpa [#allocation12], 0
    %26 = vsyncpa [#allocation4], 0
    // Predicated region
    $region2: #{tpu_custom_call.1} parent=1 // pred_check
      _
    $region3: #{tpu_custom_call.1} parent=1 // pred_check_branch
      %28 = sbr.rel (0) target = $region5
    $region4: #{tpu_custom_call.1} parent=1 // pred_region
      %s30 = ssub.s32 256, 256
      %31 = vsyncadd [#allocation3], %s30
      %s32 = sshll.u32 [#allocation2], 4
      %s33 = int_to_ptr.vmem [resolvable:$true] %s32
      %38 = dma.hbm_to_vmem [thread:$0]  %s0, 256, %s33, [#allocation3], 128, 128, 8
    $region5: #{tpu_custom_call.1} parent=1 // pred_fallthru
      _
    // Predicated region
    $region6: #{tpu_custom_call.1} parent=1 // pred_check
      _
    $region7: #{tpu_custom_call.1} parent=1 // pred_check_branch
      %40 = sbr.rel (0) target = $region9
    $region8: #{tpu_custom_call.1} parent=1 // pred_region
      %s42 = ssub.s32 4096, 4096
      %43 = vsyncadd [#allocation6], %s42
      %s44 = sshll.u32 [#allocation5], 4
      %s45 = int_to_ptr.vmem [resolvable:$true] %s44
      %50 = dma.hbm_to_vmem [thread:$0]  %s1, 4096, %s45, [#allocation6], 256, 256, 16
    $region9: #{tpu_custom_call.1} parent=1 // pred_fallthru
      _
    // Predicated region
    $region10: #{tpu_custom_call.1} parent=1 // pred_check
      _
    $region11: #{tpu_custom_call.1} parent=1 // pred_check_branch
      %52 = sbr.rel (0) target = $region13
    $region12: #{tpu_custom_call.1} parent=1 // pred_region
      _
    $region13: #{tpu_custom_call.1} parent=1 // pred_fallthru
      _
    // Predicated region
    $region14: #{tpu_custom_call.1} parent=1 // pred_check
      _
    $region15: #{tpu_custom_call.1} parent=1 // pred_check_branch
      %54 = sbr.rel (0) target = $region17
    $region16: #{tpu_custom_call.1} parent=1 // pred_region
      %s56 = ssub.s32 8192, 8192
      %57 = vsyncadd [#allocation6], %s56
      %s58 = sshll.u32 [#allocation7], 4
      %s59 = int_to_ptr.vmem [resolvable:$true] %s58
      %64 = dma.hbm_to_vmem [thread:$0]  %s3, 8192, %s59, [#allocation6], 256, 256, 16
    $region17: #{tpu_custom_call.1} parent=1 // pred_fallthru
      _
    // Predicated region
    $region18: #{tpu_custom_call.1} parent=1 // pred_check
      _
    $region19: #{tpu_custom_call.1} parent=1 // pred_check_branch
      %66 = sbr.rel (0) target = $region21
    $region20: #{tpu_custom_call.1} parent=1 // pred_region
      _
    $region21: #{tpu_custom_call.1} parent=1 // pred_fallthru
      _
    // Predicated region
    $region22: #{tpu_custom_call.1} parent=1 // pred_check
      _
    $region23: #{tpu_custom_call.1} parent=1 // pred_check_branch
      %68 = sbr.rel (0) target = $region25
    $region24: #{tpu_custom_call.1} parent=1 // pred_region
      %s70 = ssub.s32 8192, 8192
      %71 = vsyncadd [#allocation9], %s70
      %s72 = sshll.u32 [#allocation8], 4
      %s73 = int_to_ptr.vmem [resolvable:$true] %s72
      %78 = dma.hbm_to_vmem [thread:$0]  %s5, 8192, %s73, [#allocation9], 256, 256, 16
    $region25: #{tpu_custom_call.1} parent=1 // pred_fallthru
      _
    // Predicated region
    $region26: #{tpu_custom_call.1} parent=1 // pred_check
      _
    $region27: #{tpu_custom_call.1} parent=1 // pred_check_branch
      %80 = sbr.rel (0) target = $region29
    $region28: #{tpu_custom_call.1} parent=1 // pred_region
      _
    $region29: #{tpu_custom_call.1} parent=1 // pred_fallthru
      _
    // Predicated region
    $region30: #{tpu_custom_call.1} parent=1 // pred_check
      _
    $region31: #{tpu_custom_call.1} parent=1 // pred_check_branch
      %82 = sbr.rel (0) target = $region33
    $region32: #{tpu_custom_call.1} parent=1 // pred_region
      _
    $region33: #{tpu_custom_call.1} parent=1 // pred_fallthru
      _
    // Predicated region
    $region34: #{tpu_custom_call.1} parent=1 // pred_check
      _
    $region35: #{tpu_custom_call.1} parent=1 // pred_check_branch
      %84 = sbr.rel (0) target = $region37
    $region36: #{tpu_custom_call.1} parent=1 // pred_region
      _
    $region37: #{tpu_custom_call.1} parent=1 // pred_fallthru
      _
    // Predicated region
    $region38: #{tpu_custom_call.1} parent=1 // pred_check
      _
    $region39: #{tpu_custom_call.1} parent=1 // pred_check_branch
      %86 = sbr.rel (0) target = $region41
    $region40: #{tpu_custom_call.1} parent=1 // pred_region
      %s88 = ssub.s32 16384, 16384
      %89 = vsyncadd [#allocation9], %s88
      %s90 = sshll.u32 [#allocation10], 4
      %s91 = int_to_ptr.vmem [resolvable:$true] %s90
      %96 = dma.hbm_to_vmem [thread:$0]  %s9, 16384, %s91, [#allocation9], 512, 512, 32
    $region41: #{tpu_custom_call.1} parent=1 // pred_fallthru
      _
    // Predicated region
    $region42: #{tpu_custom_call.1} parent=1 // pred_check
      _
    $region43: #{tpu_custom_call.1} parent=1 // pred_check_branch
      %98 = sbr.rel (0) target = $region45
    $region44: #{tpu_custom_call.1} parent=1 // pred_region
      _
    $region45: #{tpu_custom_call.1} parent=1 // pred_fallthru
      _
    // Predicated region
    $region46: #{tpu_custom_call.1} parent=1 // pred_check
      _
    $region47: #{tpu_custom_call.1} parent=1 // pred_check_branch
      %100 = sbr.rel (0) target = $region49
    $region48: #{tpu_custom_call.1} parent=1 // pred_region
      %s102 = ssub.s32 16384, 16384
      %103 = vsyncadd [#allocation12], %s102
      %s104 = sshll.u32 [#allocation11], 4
      %s105 = int_to_ptr.vmem [resolvable:$true] %s104
      %110 = dma.hbm_to_vmem [thread:$0]  %s11, 16384, %s105, [#allocation12], 256, 256, 16
    $region49: #{tpu_custom_call.1} parent=1 // pred_fallthru
      _
    // Predicated region
    $region50: #{tpu_custom_call.1} parent=1 // pred_check
      _
    $region51: #{tpu_custom_call.1} parent=1 // pred_check_branch
      %112 = sbr.rel (0) target = $region53
    $region52: #{tpu_custom_call.1} parent=1 // pred_region
      _
    $region53: #{tpu_custom_call.1} parent=1 // pred_fallthru
      _
    // Predicated region
    $region54: #{tpu_custom_call.1} parent=1 // pred_check
      _
    $region55: #{tpu_custom_call.1} parent=1 // pred_check_branch
      %114 = sbr.rel (0) target = $region57
    $region56: #{tpu_custom_call.1} parent=1 // pred_region
      _
    $region57: #{tpu_custom_call.1} parent=1 // pred_fallthru
      _
    // Predicated region
    $region58: #{tpu_custom_call.1} parent=1 // pred_check
      _
    $region59: #{tpu_custom_call.1} parent=1 // pred_check_branch
      %116 = sbr.rel (0) target = $region61
    $region60: #{tpu_custom_call.1} parent=1 // pred_region
      _
    $region61: #{tpu_custom_call.1} parent=1 // pred_fallthru
      _
    // Predicated region
    $region62: #{tpu_custom_call.1} parent=1 // pred_check
      _
    $region63: #{tpu_custom_call.1} parent=1 // pred_check_branch
      %118 = sbr.rel (0) target = $region65
    $region64: #{tpu_custom_call.1} parent=1 // pred_region
      %s120 = ssub.s32 4096, 4096
      %121 = vsyncadd [#allocation12], %s120
      %s122 = sshll.u32 [#allocation13], 4
      %s123 = int_to_ptr.vmem [resolvable:$true] %s122
      %128 = dma.hbm_to_vmem [thread:$0]  %s15, 4096, %s123, [#allocation12], 128, 128, 8
    $region65: #{tpu_custom_call.1} parent=1 // pred_fallthru
      _
    // Predicated region
    $region66: #{tpu_custom_call.1} parent=1 // pred_check
      _
    $region67: #{tpu_custom_call.1} parent=1 // pred_check_branch
      %130 = sbr.rel (0) target = $region69
    $region68: #{tpu_custom_call.1} parent=1 // pred_region
      _
    $region69: #{tpu_custom_call.1} parent=1 // pred_fallthru
      _
    // Predicated region
    $region70: #{tpu_custom_call.1} parent=1 // pred_check
      _
    $region71: #{tpu_custom_call.1} parent=1 // pred_check_branch
      %132 = sbr.rel (0) target = $region73
    $region72: #{tpu_custom_call.1} parent=1 // pred_region
      %133 = dma.done [#allocation3], 256
    $region73: #{tpu_custom_call.1} parent=1 // pred_fallthru
      _
    // Predicated region
    $region74: #{tpu_custom_call.1} parent=1 // pred_check
      _
    $region75: #{tpu_custom_call.1} parent=1 // pred_check_branch
      %135 = sbr.rel (0) target = $region77
    $region76: #{tpu_custom_call.1} parent=1 // pred_region
      %136 = dma.done [#allocation6], 4096
    $region77: #{tpu_custom_call.1} parent=1 // pred_fallthru
      _
    // Predicated region
    $region78: #{tpu_custom_call.1} parent=1 // pred_check
      _
    $region79: #{tpu_custom_call.1} parent=1 // pred_check_branch
      %138 = sbr.rel (0) target = $region81
    $region80: #{tpu_custom_call.1} parent=1 // pred_region
      %139 = dma.done [#allocation6], 8192
    $region81: #{tpu_custom_call.1} parent=1 // pred_fallthru
      _
    // Predicated region
    $region82: #{tpu_custom_call.1} parent=1 // pred_check
      _
    $region83: #{tpu_custom_call.1} parent=1 // pred_check_branch
      %141 = sbr.rel (0) target = $region85
    $region84: #{tpu_custom_call.1} parent=1 // pred_region
      %142 = dma.done [#allocation9], 8192
    $region85: #{tpu_custom_call.1} parent=1 // pred_fallthru
      _
    // Predicated region
    $region86: #{tpu_custom_call.1} parent=1 // pred_check
      _
    $region87: #{tpu_custom_call.1} parent=1 // pred_check_branch
      %144 = sbr.rel (0) target = $region89
    $region88: #{tpu_custom_call.1} parent=1 // pred_region
      %145 = dma.done [#allocation9], 16384
    $region89: #{tpu_custom_call.1} parent=1 // pred_fallthru
      _
    // Predicated region
    $region90: #{tpu_custom_call.1} parent=1 // pred_check
      _
    $region91: #{tpu_custom_call.1} parent=1 // pred_check_branch
      %147 = sbr.rel (0) target = $region93
    $region92: #{tpu_custom_call.1} parent=1 // pred_region
      %148 = dma.done [#allocation12], 16384
    $region93: #{tpu_custom_call.1} parent=1 // pred_fallthru
      _
    // Predicated region
    $region94: #{tpu_custom_call.1} parent=1 // pred_check
      _
    $region95: #{tpu_custom_call.1} parent=1 // pred_check_branch
      %150 = sbr.rel (0) target = $region97
    $region96: #{tpu_custom_call.1} parent=1 // pred_region
      %151 = dma.done [#allocation12], 4096
    $region97: #{tpu_custom_call.1} parent=1 // pred_fallthru
      _
    %v152 = vld [vmem:[#allocation2] sm:$0xff]
    %v153 = vld [vmem:[#allocation2 + $0x8] sm:$0xff]
    %v154 = vld [vmem:[#allocation5] sm:$0xff]
    %v155 = vld [vmem:[#allocation5 + $0x8] sm:$0xff]
    %v156 = vld [vmem:[#allocation5 + $0x10] sm:$0xff]
    %v157 = vld [vmem:[#allocation5 + $0x18] sm:$0xff]
    %v158 = vld [vmem:[#allocation5 + $0x20] sm:$0xff]
    %v159 = vld [vmem:[#allocation5 + $0x28] sm:$0xff]
    %v160 = vld [vmem:[#allocation5 + $0x30] sm:$0xff]
    %v161 = vld [vmem:[#allocation5 + $0x38] sm:$0xff]
    %v162 = vld [vmem:[#allocation5 + $0x40] sm:$0xff]
    %v163 = vld [vmem:[#allocation5 + $0x48] sm:$0xff]
    %v164 = vld [vmem:[#allocation5 + $0x50] sm:$0xff]
    %v165 = vld [vmem:[#allocation5 + $0x58] sm:$0xff]
    %v166 = vld [vmem:[#allocation5 + $0x60] sm:$0xff]
    %v167 = vld [vmem:[#allocation5 + $0x68] sm:$0xff]
    %v168 = vld [vmem:[#allocation5 + $0x70] sm:$0xff]
    %v169 = vld [vmem:[#allocation5 + $0x78] sm:$0xff]
    %v170 = vld [vmem:[#allocation5 + $0x80] sm:$0xff]
    %v171 = vld [vmem:[#allocation5 + $0x88] sm:$0xff]
    %v172 = vld [vmem:[#allocation5 + $0x90] sm:$0xff]
    %v173 = vld [vmem:[#allocation5 + $0x98] sm:$0xff]
    %v174 = vld [vmem:[#allocation5 + $0xa0] sm:$0xff]
    %v175 = vld [vmem:[#allocation5 + $0xa8] sm:$0xff]
    %v176 = vld [vmem:[#allocation5 + $0xb0] sm:$0xff]
    %v177 = vld [vmem:[#allocation5 + $0xb8] sm:$0xff]
    %v178 = vld [vmem:[#allocation5 + $0xc0] sm:$0xff]
    %v179 = vld [vmem:[#allocation5 + $0xc8] sm:$0xff]
    %v180 = vld [vmem:[#allocation5 + $0xd0] sm:$0xff]
    %v181 = vld [vmem:[#allocation5 + $0xd8] sm:$0xff]
    %v182 = vld [vmem:[#allocation5 + $0xe0] sm:$0xff]
    %v183 = vld [vmem:[#allocation5 + $0xe8] sm:$0xff]
    %v184 = vld [vmem:[#allocation5 + $0xf0] sm:$0xff]
    %v185 = vld [vmem:[#allocation5 + $0xf8] sm:$0xff]
    %v186 = vld [vmem:[%s2] sm:$0x3]
    %v188 = vlaneseq
    %v189 = vshrl.u32 %v188, 7
    %v190 = vsub.s32 0, %v189
    %v191 = vrot.slane %v186, %v190
    %v192 = vlaneseq
    %v193 = vshrl.u32 %v192, 7
    %v194 = vsub.s32 1, %v193
    %v195 = vrot.slane %v186, %v194
    %198 = vmatprep.subr.mxu0 %v155
    %199 = vmatpush1.msra.mxu0 %v154
    %200 = vmatprep.subr.mxu0 %v157
    %201 = vmatpush1.msra.mxu0 %v156
    %202 = vmatprep.subr.mxu0 %v159
    %203 = vmatpush1.msra.mxu0 %v158
    %204 = vmatprep.subr.mxu0 %v161
    %205 = vmatpush1.msra.mxu0 %v160
    %206 = vmatprep.subr.mxu0 %v163
    %207 = vmatpush1.msra.mxu0 %v162
    %208 = vmatprep.subr.mxu0 %v165
    %209 = vmatpush1.msra.mxu0 %v164
    %210 = vmatprep.subr.mxu0 %v167
    %211 = vmatpush1.msra.mxu0 %v166
    %212 = vmatprep.subr.mxu0 %v169
    %213 = vmatpush1.msra.mxu0 %v168
    %214 = vmatprep.subr.mxu0 %v171
    %215 = vmatpush1.msra.mxu0 %v170
    %216 = vmatprep.subr.mxu0 %v173
    %217 = vmatpush1.msra.mxu0 %v172
    %218 = vmatprep.subr.mxu0 %v175
    %219 = vmatpush1.msra.mxu0 %v174
    %220 = vmatprep.subr.mxu0 %v177
    %221 = vmatpush1.msra.mxu0 %v176
    %222 = vmatprep.subr.mxu0 %v179
    %223 = vmatpush1.msra.mxu0 %v178
    %224 = vmatprep.subr.mxu0 %v181
    %225 = vmatpush1.msra.mxu0 %v180
    %226 = vmatprep.subr.mxu0 %v183
    %227 = vmatpush1.msra.mxu0 %v182
    %228 = vmatprep.subr.mxu0 %v185
    %229 = vmatpush1.msra.mxu0 %v184
    %230 = vmatprep.subr.mxu0 0.0
    %231 = vmatpush1.msra.mxu0 0.0
    %232 = vmatprep.subr.mxu0 0.0
    %233 = vmatpush1.msra.mxu0 0.0
    %234 = vmatprep.subr.mxu0 0.0
    %235 = vmatpush1.msra.mxu0 0.0
    %236 = vmatprep.subr.mxu0 0.0
    %237 = vmatpush1.msra.mxu0 0.0
    %238 = vmatprep.subr.mxu0 0.0
    %239 = vmatpush1.msra.mxu0 0.0
    %240 = vmatprep.subr.mxu0 0.0
    %241 = vmatpush1.msra.mxu0 0.0
    %242 = vmatprep.subr.mxu0 0.0
    %243 = vmatpush1.msra.mxu0 0.0
    %244 = vmatprep.subr.mxu0 0.0
    %245 = vmatpush1.msra.mxu0 0.0
    %246 = vmatprep.subr.mxu0 0.0
    %247 = vmatpush1.msra.mxu0 0.0
    %248 = vmatprep.subr.mxu0 0.0
    %249 = vmatpush1.msra.mxu0 0.0
    %250 = vmatprep.subr.mxu0 0.0
    %251 = vmatpush1.msra.mxu0 0.0
    %252 = vmatprep.subr.mxu0 0.0
    %253 = vmatpush1.msra.mxu0 0.0
    %254 = vmatprep.subr.mxu0 0.0
    %255 = vmatpush1.msra.mxu0 0.0
    %256 = vmatprep.subr.mxu0 0.0
    %257 = vmatpush1.msra.mxu0 0.0
    %258 = vmatprep.subr.mxu0 0.0
    %259 = vmatpush1.msra.mxu0 0.0
    %260 = vmatprep.subr.mxu0 0.0
    %261 = vmatpush1.msra.mxu0 0.0
    %262 = vmatprep.mubr.f32.mxu0 0.0
    %263 = vmatmul.mubr.f32.gmra.mrb[0].mxu0 %v152
    %v264 = vpop.f32.mrb[0].mxu0
    %v265 = vadd.f32 %v191, %v264
    %v266 = vpop.f32.mrb[0].mxu0
    %v267 = vadd.f32 %v195, %v266
    %268 = vmatprep.mubr.f32.mxu0 0.0
    %269 = vmatmul.mubr.f32.gmra.mrb[0].mxu0 %v153
    %v270 = vpop.f32.mrb[0].mxu0
    %v271 = vadd.f32 %v191, %v270
    %v272 = vpop.f32.mrb[0].mxu0
    %v273 = vadd.f32 %v195, %v272
    %274 = vdwg.mxu0
    %v275 = vmax.f32 %v265, 0.0
    %v276 = vmax.f32 %v267, 0.0
    %v277 = vmax.f32 %v271, 0.0
    %v278 = vmax.f32 %v273, 0.0
    %v279 = vld [vmem:[#allocation7] sm:$0xff]
    %v280 = vld [vmem:[#allocation7 + $0x8] sm:$0xff]
    %v281 = vld [vmem:[#allocation7 + $0x10] sm:$0xff]
    %v282 = vld [vmem:[#allocation7 + $0x18] sm:$0xff]
    %v283 = vld [vmem:[#allocation7 + $0x20] sm:$0xff]
    %v284 = vld [vmem:[#allocation7 + $0x28] sm:$0xff]
    %v285 = vld [vmem:[#allocation7 + $0x30] sm:$0xff]
    %v286 = vld [vmem:[#allocation7 + $0x38] sm:$0xff]
    %v287 = vld [vmem:[#allocation7 + $0x40] sm:$0xff]
    %v288 = vld [vmem:[#allocation7 + $0x48] sm:$0xff]
    %v289 = vld [vmem:[#allocation7 + $0x50] sm:$0xff]
    %v290 = vld [vmem:[#allocation7 + $0x58] sm:$0xff]
    %v291 = vld [vmem:[#allocation7 + $0x60] sm:$0xff]
    %v292 = vld [vmem:[#allocation7 + $0x68] sm:$0xff]
    %v293 = vld [vmem:[#allocation7 + $0x70] sm:$0xff]
    %v294 = vld [vmem:[#allocation7 + $0x78] sm:$0xff]
    %v295 = vld [vmem:[#allocation7 + $0x80] sm:$0xff]
    %v296 = vld [vmem:[#allocation7 + $0x88] sm:$0xff]
    %v297 = vld [vmem:[#allocation7 + $0x90] sm:$0xff]
    %v298 = vld [vmem:[#allocation7 + $0x98] sm:$0xff]
    %v299 = vld [vmem:[#allocation7 + $0xa0] sm:$0xff]
    %v300 = vld [vmem:[#allocation7 + $0xa8] sm:$0xff]
    %v301 = vld [vmem:[#allocation7 + $0xb0] sm:$0xff]
    %v302 = vld [vmem:[#allocation7 + $0xb8] sm:$0xff]
    %v303 = vld [vmem:[#allocation7 + $0xc0] sm:$0xff]
    %v304 = vld [vmem:[#allocation7 + $0xc8] sm:$0xff]
    %v305 = vld [vmem:[#allocation7 + $0xd0] sm:$0xff]
    %v306 = vld [vmem:[#allocation7 + $0xd8] sm:$0xff]
    %v307 = vld [vmem:[#allocation7 + $0xe0] sm:$0xff]
    %v308 = vld [vmem:[#allocation7 + $0xe8] sm:$0xff]
    %v309 = vld [vmem:[#allocation7 + $0xf0] sm:$0xff]
    %v310 = vld [vmem:[#allocation7 + $0xf8] sm:$0xff]
    %v311 = vld [vmem:[#allocation7 + $0x100] sm:$0xff]
    %v312 = vld [vmem:[#allocation7 + $0x108] sm:$0xff]
    %v313 = vld [vmem:[#allocation7 + $0x110] sm:$0xff]
    %v314 = vld [vmem:[#allocation7 + $0x118] sm:$0xff]
    %v315 = vld [vmem:[#allocation7 + $0x120] sm:$0xff]
    %v316 = vld [vmem:[#allocation7 + $0x128] sm:$0xff]
    %v317 = vld [vmem:[#allocation7 + $0x130] sm:$0xff]
    %v318 = vld [vmem:[#allocation7 + $0x138] sm:$0xff]
    %v319 = vld [vmem:[#allocation7 + $0x140] sm:$0xff]
    %v320 = vld [vmem:[#allocation7 + $0x148] sm:$0xff]
    %v321 = vld [vmem:[#allocation7 + $0x150] sm:$0xff]
    %v322 = vld [vmem:[#allocation7 + $0x158] sm:$0xff]
    %v323 = vld [vmem:[#allocation7 + $0x160] sm:$0xff]
    %v324 = vld [vmem:[#allocation7 + $0x168] sm:$0xff]
    %v325 = vld [vmem:[#allocation7 + $0x170] sm:$0xff]
    %v326 = vld [vmem:[#allocation7 + $0x178] sm:$0xff]
    %v327 = vld [vmem:[#allocation7 + $0x180] sm:$0xff]
    %v328 = vld [vmem:[#allocation7 + $0x188] sm:$0xff]
    %v329 = vld [vmem:[#allocation7 + $0x190] sm:$0xff]
    %v330 = vld [vmem:[#allocation7 + $0x198] sm:$0xff]
    %v331 = vld [vmem:[#allocation7 + $0x1a0] sm:$0xff]
    %v332 = vld [vmem:[#allocation7 + $0x1a8] sm:$0xff]
    %v333 = vld [vmem:[#allocation7 + $0x1b0] sm:$0xff]
    %v334 = vld [vmem:[#allocation7 + $0x1b8] sm:$0xff]
    %v335 = vld [vmem:[#allocation7 + $0x1c0] sm:$0xff]
    %v336 = vld [vmem:[#allocation7 + $0x1c8] sm:$0xff]
    %v337 = vld [vmem:[#allocation7 + $0x1d0] sm:$0xff]
    %v338 = vld [vmem:[#allocation7 + $0x1d8] sm:$0xff]
    %v339 = vld [vmem:[#allocation7 + $0x1e0] sm:$0xff]
    %v340 = vld [vmem:[#allocation7 + $0x1e8] sm:$0xff]
    %v341 = vld [vmem:[#allocation7 + $0x1f0] sm:$0xff]
    %v342 = vld [vmem:[#allocation7 + $0x1f8] sm:$0xff]
    %v343 = vld [vmem:[%s4] sm:$0x3]
    %v345 = vlaneseq
    %v346 = vshrl.u32 %v345, 7
    %v347 = vsub.s32 0, %v346
    %v348 = vrot.slane %v343, %v347
    %v349 = vlaneseq
    %v350 = vshrl.u32 %v349, 7
    %v351 = vsub.s32 1, %v350
    %v352 = vrot.slane %v343, %v351
    %355 = vmatprep.subr.mxu0 %v280
    %356 = vmatpush1.msra.mxu0 %v279
    %357 = vmatprep.subr.mxu0 %v282
    %358 = vmatpush1.msra.mxu0 %v281
    %359 = vmatprep.subr.mxu0 %v284
    %360 = vmatpush1.msra.mxu0 %v283
    %361 = vmatprep.subr.mxu0 %v286
    %362 = vmatpush1.msra.mxu0 %v285
    %363 = vmatprep.subr.mxu0 %v288
    %364 = vmatpush1.msra.mxu0 %v287
    %365 = vmatprep.subr.mxu0 %v290
    %366 = vmatpush1.msra.mxu0 %v289
    %367 = vmatprep.subr.mxu0 %v292
    %368 = vmatpush1.msra.mxu0 %v291
    %369 = vmatprep.subr.mxu0 %v294
    %370 = vmatpush1.msra.mxu0 %v293
    %371 = vmatprep.subr.mxu0 %v296
    %372 = vmatpush1.msra.mxu0 %v295
    %373 = vmatprep.subr.mxu0 %v298
    %374 = vmatpush1.msra.mxu0 %v297
    %375 = vmatprep.subr.mxu0 %v300
    %376 = vmatpush1.msra.mxu0 %v299
    %377 = vmatprep.subr.mxu0 %v302
    %378 = vmatpush1.msra.mxu0 %v301
    %379 = vmatprep.subr.mxu0 %v304
    %380 = vmatpush1.msra.mxu0 %v303
    %381 = vmatprep.subr.mxu0 %v306
    %382 = vmatpush1.msra.mxu0 %v305
    %383 = vmatprep.subr.mxu0 %v308
    %384 = vmatpush1.msra.mxu0 %v307
    %385 = vmatprep.subr.mxu0 %v310
    %386 = vmatpush1.msra.mxu0 %v309
    %387 = vmatprep.subr.mxu0 %v312
    %388 = vmatpush1.msra.mxu0 %v311
    %389 = vmatprep.subr.mxu0 %v314
    %390 = vmatpush1.msra.mxu0 %v313
    %391 = vmatprep.subr.mxu0 %v316
    %392 = vmatpush1.msra.mxu0 %v315
    %393 = vmatprep.subr.mxu0 %v318
    %394 = vmatpush1.msra.mxu0 %v317
    %395 = vmatprep.subr.mxu0 %v320
    %396 = vmatpush1.msra.mxu0 %v319
    %397 = vmatprep.subr.mxu0 %v322
    %398 = vmatpush1.msra.mxu0 %v321
    %399 = vmatprep.subr.mxu0 %v324
    %400 = vmatpush1.msra.mxu0 %v323
    %401 = vmatprep.subr.mxu0 %v326
    %402 = vmatpush1.msra.mxu0 %v325
    %403 = vmatprep.subr.mxu0 %v328
    %404 = vmatpush1.msra.mxu0 %v327
    %405 = vmatprep.subr.mxu0 %v330
    %406 = vmatpush1.msra.mxu0 %v329
    %407 = vmatprep.subr.mxu0 %v332
    %408 = vmatpush1.msra.mxu0 %v331
    %409 = vmatprep.subr.mxu0 %v334
    %410 = vmatpush1.msra.mxu0 %v333
    %411 = vmatprep.subr.mxu0 %v336
    %412 = vmatpush1.msra.mxu0 %v335
    %413 = vmatprep.subr.mxu0 %v338
    %414 = vmatpush1.msra.mxu0 %v337
    %415 = vmatprep.subr.mxu0 %v340
    %416 = vmatpush1.msra.mxu0 %v339
    %417 = vmatprep.subr.mxu0 %v342
    %418 = vmatpush1.msra.mxu0 %v341
    %419 = vmatprep.mubr.f32.mxu0 %v276
    %420 = vmatmul.mubr.f32.gmra.mrb[0].mxu0 %v275
    %v421 = vpop.f32.mrb[0].mxu0
    %v422 = vadd.f32 %v348, %v421
    %v423 = vpop.f32.mrb[0].mxu0
    %v424 = vadd.f32 %v352, %v423
    %425 = vmatprep.mubr.f32.mxu0 %v278
    %426 = vmatmul.mubr.f32.gmra.mrb[0].mxu0 %v277
    %v427 = vpop.f32.mrb[0].mxu0
    %v428 = vadd.f32 %v348, %v427
    %v429 = vpop.f32.mrb[0].mxu0
    %v430 = vadd.f32 %v352, %v429
    %431 = vdwg.mxu0
    %v432 = vmax.f32 %v422, 0.0
    %v433 = vmax.f32 %v424, 0.0
    %v434 = vmax.f32 %v428, 0.0
    %v435 = vmax.f32 %v430, 0.0
    %v436 = vld [vmem:[#allocation8] sm:$0xff]
    %v437 = vld [vmem:[#allocation8 + $0x8] sm:$0xff]
    %v438 = vld [vmem:[#allocation8 + $0x10] sm:$0xff]
    %v439 = vld [vmem:[#allocation8 + $0x18] sm:$0xff]
    %v440 = vld [vmem:[#allocation8 + $0x20] sm:$0xff]
    %v441 = vld [vmem:[#allocation8 + $0x28] sm:$0xff]
    %v442 = vld [vmem:[#allocation8 + $0x30] sm:$0xff]
    %v443 = vld [vmem:[#allocation8 + $0x38] sm:$0xff]
    %v444 = vld [vmem:[#allocation8 + $0x40] sm:$0xff]
    %v445 = vld [vmem:[#allocation8 + $0x48] sm:$0xff]
    %v446 = vld [vmem:[#allocation8 + $0x50] sm:$0xff]
    %v447 = vld [vmem:[#allocation8 + $0x58] sm:$0xff]
    %v448 = vld [vmem:[#allocation8 + $0x60] sm:$0xff]
    %v449 = vld [vmem:[#allocation8 + $0x68] sm:$0xff]
    %v450 = vld [vmem:[#allocation8 + $0x70] sm:$0xff]
    %v451 = vld [vmem:[#allocation8 + $0x78] sm:$0xff]
    %v452 = vld [vmem:[#allocation8 + $0x80] sm:$0xff]
    %v453 = vld [vmem:[#allocation8 + $0x88] sm:$0xff]
    %v454 = vld [vmem:[#allocation8 + $0x90] sm:$0xff]
    %v455 = vld [vmem:[#allocation8 + $0x98] sm:$0xff]
    %v456 = vld [vmem:[#allocation8 + $0xa0] sm:$0xff]
    %v457 = vld [vmem:[#allocation8 + $0xa8] sm:$0xff]
    %v458 = vld [vmem:[#allocation8 + $0xb0] sm:$0xff]
    %v459 = vld [vmem:[#allocation8 + $0xb8] sm:$0xff]
    %v460 = vld [vmem:[#allocation8 + $0xc0] sm:$0xff]
    %v461 = vld [vmem:[#allocation8 + $0xc8] sm:$0xff]
    %v462 = vld [vmem:[#allocation8 + $0xd0] sm:$0xff]
    %v463 = vld [vmem:[#allocation8 + $0xd8] sm:$0xff]
    %v464 = vld [vmem:[#allocation8 + $0xe0] sm:$0xff]
    %v465 = vld [vmem:[#allocation8 + $0xe8] sm:$0xff]
    %v466 = vld [vmem:[#allocation8 + $0xf0] sm:$0xff]
    %v467 = vld [vmem:[#allocation8 + $0xf8] sm:$0xff]
    %v468 = vld [vmem:[#allocation8 + $0x100] sm:$0xff]
    %v469 = vld [vmem:[#allocation8 + $0x108] sm:$0xff]
    %v470 = vld [vmem:[#allocation8 + $0x110] sm:$0xff]
    %v471 = vld [vmem:[#allocation8 + $0x118] sm:$0xff]
    %v472 = vld [vmem:[#allocation8 + $0x120] sm:$0xff]
    %v473 = vld [vmem:[#allocation8 + $0x128] sm:$0xff]
    %v474 = vld [vmem:[#allocation8 + $0x130] sm:$0xff]
    %v475 = vld [vmem:[#allocation8 + $0x138] sm:$0xff]
    %v476 = vld [vmem:[#allocation8 + $0x140] sm:$0xff]
    %v477 = vld [vmem:[#allocation8 + $0x148] sm:$0xff]
    %v478 = vld [vmem:[#allocation8 + $0x150] sm:$0xff]
    %v479 = vld [vmem:[#allocation8 + $0x158] sm:$0xff]
    %v480 = vld [vmem:[#allocation8 + $0x160] sm:$0xff]
    %v481 = vld [vmem:[#allocation8 + $0x168] sm:$0xff]
    %v482 = vld [vmem:[#allocation8 + $0x170] sm:$0xff]
    %v483 = vld [vmem:[#allocation8 + $0x178] sm:$0xff]
    %v484 = vld [vmem:[#allocation8 + $0x180] sm:$0xff]
    %v485 = vld [vmem:[#allocation8 + $0x188] sm:$0xff]
    %v486 = vld [vmem:[#allocation8 + $0x190] sm:$0xff]
    %v487 = vld [vmem:[#allocation8 + $0x198] sm:$0xff]
    %v488 = vld [vmem:[#allocation8 + $0x1a0] sm:$0xff]
    %v489 = vld [vmem:[#allocation8 + $0x1a8] sm:$0xff]
    %v490 = vld [vmem:[#allocation8 + $0x1b0] sm:$0xff]
    %v491 = vld [vmem:[#allocation8 + $0x1b8] sm:$0xff]
    %v492 = vld [vmem:[#allocation8 + $0x1c0] sm:$0xff]
    %v493 = vld [vmem:[#allocation8 + $0x1c8] sm:$0xff]
    %v494 = vld [vmem:[#allocation8 + $0x1d0] sm:$0xff]
    %v495 = vld [vmem:[#allocation8 + $0x1d8] sm:$0xff]
    %v496 = vld [vmem:[#allocation8 + $0x1e0] sm:$0xff]
    %v497 = vld [vmem:[#allocation8 + $0x1e8] sm:$0xff]
    %v498 = vld [vmem:[#allocation8 + $0x1f0] sm:$0xff]
    %v499 = vld [vmem:[#allocation8 + $0x1f8] sm:$0xff]
    %v500 = vld [vmem:[%s6] sm:$0x3]
    %v502 = vlaneseq
    %v503 = vshrl.u32 %v502, 7
    %v504 = vsub.s32 0, %v503
    %v505 = vrot.slane %v500, %v504
    %v506 = vlaneseq
    %v507 = vshrl.u32 %v506, 7
    %v508 = vsub.s32 1, %v507
    %v509 = vrot.slane %v500, %v508
    %512 = vmatprep.subr.mxu0 %v437
    %513 = vmatpush1.msra.mxu0 %v436
    %514 = vmatprep.subr.mxu0 %v439
    %515 = vmatpush1.msra.mxu0 %v438
    %516 = vmatprep.subr.mxu0 %v441
    %517 = vmatpush1.msra.mxu0 %v440
    %518 = vmatprep.subr.mxu0 %v443
    %519 = vmatpush1.msra.mxu0 %v442
    %520 = vmatprep.subr.mxu0 %v445
    %521 = vmatpush1.msra.mxu0 %v444
    %522 = vmatprep.subr.mxu0 %v447
    %523 = vmatpush1.msra.mxu0 %v446
    %524 = vmatprep.subr.mxu0 %v449
    %525 = vmatpush1.msra.mxu0 %v448
    %526 = vmatprep.subr.mxu0 %v451
    %527 = vmatpush1.msra.mxu0 %v450
    %528 = vmatprep.subr.mxu0 %v453
    %529 = vmatpush1.msra.mxu0 %v452
    %530 = vmatprep.subr.mxu0 %v455
    %531 = vmatpush1.msra.mxu0 %v454
    %532 = vmatprep.subr.mxu0 %v457
    %533 = vmatpush1.msra.mxu0 %v456
    %534 = vmatprep.subr.mxu0 %v459
    %535 = vmatpush1.msra.mxu0 %v458
    %536 = vmatprep.subr.mxu0 %v461
    %537 = vmatpush1.msra.mxu0 %v460
    %538 = vmatprep.subr.mxu0 %v463
    %539 = vmatpush1.msra.mxu0 %v462
    %540 = vmatprep.subr.mxu0 %v465
    %541 = vmatpush1.msra.mxu0 %v464
    %542 = vmatprep.subr.mxu0 %v467
    %543 = vmatpush1.msra.mxu0 %v466
    %544 = vmatprep.subr.mxu0 %v469
    %545 = vmatpush1.msra.mxu0 %v468
    %546 = vmatprep.subr.mxu0 %v471
    %547 = vmatpush1.msra.mxu0 %v470
    %548 = vmatprep.subr.mxu0 %v473
    %549 = vmatpush1.msra.mxu0 %v472
    %550 = vmatprep.subr.mxu0 %v475
    %551 = vmatpush1.msra.mxu0 %v474
    %552 = vmatprep.subr.mxu0 %v477
    %553 = vmatpush1.msra.mxu0 %v476
    %554 = vmatprep.subr.mxu0 %v479
    %555 = vmatpush1.msra.mxu0 %v478
    %556 = vmatprep.subr.mxu0 %v481
    %557 = vmatpush1.msra.mxu0 %v480
    %558 = vmatprep.subr.mxu0 %v483
    %559 = vmatpush1.msra.mxu0 %v482
    %560 = vmatprep.subr.mxu0 %v485
    %561 = vmatpush1.msra.mxu0 %v484
    %562 = vmatprep.subr.mxu0 %v487
    %563 = vmatpush1.msra.mxu0 %v486
    %564 = vmatprep.subr.mxu0 %v489
    %565 = vmatpush1.msra.mxu0 %v488
    %566 = vmatprep.subr.mxu0 %v491
    %567 = vmatpush1.msra.mxu0 %v490
    %568 = vmatprep.subr.mxu0 %v493
    %569 = vmatpush1.msra.mxu0 %v492
    %570 = vmatprep.subr.mxu0 %v495
    %571 = vmatpush1.msra.mxu0 %v494
    %572 = vmatprep.subr.mxu0 %v497
    %573 = vmatpush1.msra.mxu0 %v496
    %574 = vmatprep.subr.mxu0 %v499
    %575 = vmatpush1.msra.mxu0 %v498
    %576 = vmatprep.mubr.f32.mxu0 %v433
    %577 = vmatmul.mubr.f32.gmra.mrb[0].mxu0 %v432
    %v578 = vpop.f32.mrb[0].mxu0
    %v579 = vadd.f32 %v505, %v578
    %v580 = vpop.f32.mrb[0].mxu0
    %v581 = vadd.f32 %v509, %v580
    %582 = vmatprep.mubr.f32.mxu0 %v435
    %583 = vmatmul.mubr.f32.gmra.mrb[0].mxu0 %v434
    %v584 = vpop.f32.mrb[0].mxu0
    %v585 = vadd.f32 %v505, %v584
    %v586 = vpop.f32.mrb[0].mxu0
    %v587 = vadd.f32 %v509, %v586
    %588 = vdwg.mxu0
    %v589 = vadd.f32 %v432, %v579
    %v590 = vadd.f32 %v433, %v581
    %v591 = vadd.f32 %v434, %v585
    %v592 = vadd.f32 %v435, %v587
    %v593 = vld [vmem:[%s7] sm:$0x3]
    %v594 = vld [vmem:[%s8] sm:$0x3]
    %v595 = vadd.f32 %v589, %v590
    %596 = vadd.xlane.f32.xlu0 %v595
    %v597 = vpop.xlane.xlu0 %596
    %v598 = vadd.f32 %v591, %v592
    %599 = vadd.xlane.f32.xlu0 %v598
    %v600 = vpop.xlane.xlu0 %599
    %v601 = vrcp.pop 256.0
    %v602 = vmul.f32 %v597, %v601
    %v603 = vmul.f32 %v600, %v601
    %v604 = vmul.f32 %v589, %v589
    %v605 = vmul.f32 %v590, %v590
    %v606 = vmul.f32 %v591, %v591
    %v607 = vmul.f32 %v592, %v592
    %v608 = vadd.f32 %v604, %v605
    %609 = vadd.xlane.f32.xlu0 %v608
    %v610 = vpop.xlane.xlu0 %609
    %v611 = vadd.f32 %v606, %v607
    %612 = vadd.xlane.f32.xlu0 %v611
    %v613 = vpop.xlane.xlu0 %612
    %v614 = vmul.f32 %v610, %v601
    %v615 = vmul.f32 %v613, %v601
    %v616 = vmul.f32 %v602, %v602
    %v617 = vmul.f32 %v603, %v603
    %v618 = vsub.f32 %v614, %v616
    %v619 = vsub.f32 %v615, %v617
    %v620 = vmax.f32 %v618, 0.0
    %v621 = vmax.f32 %v619, 0.0
    %v622 = vsub.f32 %v589, %v602
    %v623 = vsub.f32 %v590, %v602
    %v624 = vsub.f32 %v591, %v603
    %v625 = vsub.f32 %v592, %v603
    %v626 = vadd.f32 %v620, 1e-05
    %v627 = vadd.f32 %v621, 1e-05
    %v628 = vrsqrt.pop %v626
    %v629 = vrsqrt.pop %v627
    %v630 = vmul.f32 %v622, %v628
    %v631 = vmul.f32 %v623, %v628
    %v632 = vmul.f32 %v624, %v629
    %v633 = vmul.f32 %v625, %v629
    %v635 = vlaneseq
    %v636 = vshrl.u32 %v635, 7
    %v637 = vsub.s32 0, %v636
    %v638 = vrot.slane %v593, %v637
    %v639 = vlaneseq
    %v640 = vshrl.u32 %v639, 7
    %v641 = vsub.s32 1, %v640
    %v642 = vrot.slane %v593, %v641
    %v645 = vmul.f32 %v630, %v638
    %v646 = vmul.f32 %v631, %v642
    %v647 = vmul.f32 %v632, %v638
    %v648 = vmul.f32 %v633, %v642
    %v650 = vlaneseq
    %v651 = vshrl.u32 %v650, 7
    %v652 = vsub.s32 0, %v651
    %v653 = vrot.slane %v594, %v652
    %v654 = vlaneseq
    %v655 = vshrl.u32 %v654, 7
    %v656 = vsub.s32 1, %v655
    %v657 = vrot.slane %v594, %v656
    %v660 = vadd.f32 %v645, %v653
    %v661 = vadd.f32 %v646, %v657
    %v662 = vadd.f32 %v647, %v653
    %v663 = vadd.f32 %v648, %v657
    %v664 = vld [vmem:[#allocation10] sm:$0xff]
    %v665 = vld [vmem:[#allocation10 + $0x8] sm:$0xff]
    %v666 = vld [vmem:[#allocation10 + $0x10] sm:$0xff]
    %v667 = vld [vmem:[#allocation10 + $0x18] sm:$0xff]
    %v668 = vld [vmem:[#allocation10 + $0x20] sm:$0xff]
    %v669 = vld [vmem:[#allocation10 + $0x28] sm:$0xff]
    %v670 = vld [vmem:[#allocation10 + $0x30] sm:$0xff]
    %v671 = vld [vmem:[#allocation10 + $0x38] sm:$0xff]
    %v672 = vld [vmem:[#allocation10 + $0x40] sm:$0xff]
    %v673 = vld [vmem:[#allocation10 + $0x48] sm:$0xff]
    %v674 = vld [vmem:[#allocation10 + $0x50] sm:$0xff]
    %v675 = vld [vmem:[#allocation10 + $0x58] sm:$0xff]
    %v676 = vld [vmem:[#allocation10 + $0x60] sm:$0xff]
    %v677 = vld [vmem:[#allocation10 + $0x68] sm:$0xff]
    %v678 = vld [vmem:[#allocation10 + $0x70] sm:$0xff]
    %v679 = vld [vmem:[#allocation10 + $0x78] sm:$0xff]
    %v680 = vld [vmem:[#allocation10 + $0x80] sm:$0xff]
    %v681 = vld [vmem:[#allocation10 + $0x88] sm:$0xff]
    %v682 = vld [vmem:[#allocation10 + $0x90] sm:$0xff]
    %v683 = vld [vmem:[#allocation10 + $0x98] sm:$0xff]
    %v684 = vld [vmem:[#allocation10 + $0xa0] sm:$0xff]
    %v685 = vld [vmem:[#allocation10 + $0xa8] sm:$0xff]
    %v686 = vld [vmem:[#allocation10 + $0xb0] sm:$0xff]
    %v687 = vld [vmem:[#allocation10 + $0xb8] sm:$0xff]
    %v688 = vld [vmem:[#allocation10 + $0xc0] sm:$0xff]
    %v689 = vld [vmem:[#allocation10 + $0xc8] sm:$0xff]
    %v690 = vld [vmem:[#allocation10 + $0xd0] sm:$0xff]
    %v691 = vld [vmem:[#allocation10 + $0xd8] sm:$0xff]
    %v692 = vld [vmem:[#allocation10 + $0xe0] sm:$0xff]
    %v693 = vld [vmem:[#allocation10 + $0xe8] sm:$0xff]
    %v694 = vld [vmem:[#allocation10 + $0xf0] sm:$0xff]
    %v695 = vld [vmem:[#allocation10 + $0xf8] sm:$0xff]
    %v696 = vld [vmem:[#allocation10 + $0x100] sm:$0xff]
    %v697 = vld [vmem:[#allocation10 + $0x108] sm:$0xff]
    %v698 = vld [vmem:[#allocation10 + $0x110] sm:$0xff]
    %v699 = vld [vmem:[#allocation10 + $0x118] sm:$0xff]
    %v700 = vld [vmem:[#allocation10 + $0x120] sm:$0xff]
    %v701 = vld [vmem:[#allocation10 + $0x128] sm:$0xff]
    %v702 = vld [vmem:[#allocation10 + $0x130] sm:$0xff]
    %v703 = vld [vmem:[#allocation10 + $0x138] sm:$0xff]
    %v704 = vld [vmem:[#allocation10 + $0x140] sm:$0xff]
    %v705 = vld [vmem:[#allocation10 + $0x148] sm:$0xff]
    %v706 = vld [vmem:[#allocation10 + $0x150] sm:$0xff]
    %v707 = vld [vmem:[#allocation10 + $0x158] sm:$0xff]
    %v708 = vld [vmem:[#allocation10 + $0x160] sm:$0xff]
    %v709 = vld [vmem:[#allocation10 + $0x168] sm:$0xff]
    %v710 = vld [vmem:[#allocation10 + $0x170] sm:$0xff]
    %v711 = vld [vmem:[#allocation10 + $0x178] sm:$0xff]
    %v712 = vld [vmem:[#allocation10 + $0x180] sm:$0xff]
    %v713 = vld [vmem:[#allocation10 + $0x188] sm:$0xff]
    %v714 = vld [vmem:[#allocation10 + $0x190] sm:$0xff]
    %v715 = vld [vmem:[#allocation10 + $0x198] sm:$0xff]
    %v716 = vld [vmem:[#allocation10 + $0x1a0] sm:$0xff]
    %v717 = vld [vmem:[#allocation10 + $0x1a8] sm:$0xff]
    %v718 = vld [vmem:[#allocation10 + $0x1b0] sm:$0xff]
    %v719 = vld [vmem:[#allocation10 + $0x1b8] sm:$0xff]
    %v720 = vld [vmem:[#allocation10 + $0x1c0] sm:$0xff]
    %v721 = vld [vmem:[#allocation10 + $0x1c8] sm:$0xff]
    %v722 = vld [vmem:[#allocation10 + $0x1d0] sm:$0xff]
    %v723 = vld [vmem:[#allocation10 + $0x1d8] sm:$0xff]
    %v724 = vld [vmem:[#allocation10 + $0x1e0] sm:$0xff]
    %v725 = vld [vmem:[#allocation10 + $0x1e8] sm:$0xff]
    %v726 = vld [vmem:[#allocation10 + $0x1f0] sm:$0xff]
    %v727 = vld [vmem:[#allocation10 + $0x1f8] sm:$0xff]
    %v728 = vld [vmem:[#allocation10 + $0x200] sm:$0xff]
    %v729 = vld [vmem:[#allocation10 + $0x208] sm:$0xff]
    %v730 = vld [vmem:[#allocation10 + $0x210] sm:$0xff]
    %v731 = vld [vmem:[#allocation10 + $0x218] sm:$0xff]
    %v732 = vld [vmem:[#allocation10 + $0x220] sm:$0xff]
    %v733 = vld [vmem:[#allocation10 + $0x228] sm:$0xff]
    %v734 = vld [vmem:[#allocation10 + $0x230] sm:$0xff]
    %v735 = vld [vmem:[#allocation10 + $0x238] sm:$0xff]
    %v736 = vld [vmem:[#allocation10 + $0x240] sm:$0xff]
    %v737 = vld [vmem:[#allocation10 + $0x248] sm:$0xff]
    %v738 = vld [vmem:[#allocation10 + $0x250] sm:$0xff]
    %v739 = vld [vmem:[#allocation10 + $0x258] sm:$0xff]
    %v740 = vld [vmem:[#allocation10 + $0x260] sm:$0xff]
    %v741 = vld [vmem:[#allocation10 + $0x268] sm:$0xff]
    %v742 = vld [vmem:[#allocation10 + $0x270] sm:$0xff]
    %v743 = vld [vmem:[#allocation10 + $0x278] sm:$0xff]
    %v744 = vld [vmem:[#allocation10 + $0x280] sm:$0xff]
    %v745 = vld [vmem:[#allocation10 + $0x288] sm:$0xff]
    %v746 = vld [vmem:[#allocation10 + $0x290] sm:$0xff]
    %v747 = vld [vmem:[#allocation10 + $0x298] sm:$0xff]
    %v748 = vld [vmem:[#allocation10 + $0x2a0] sm:$0xff]
    %v749 = vld [vmem:[#allocation10 + $0x2a8] sm:$0xff]
    %v750 = vld [vmem:[#allocation10 + $0x2b0] sm:$0xff]
    %v751 = vld [vmem:[#allocation10 + $0x2b8] sm:$0xff]
    %v752 = vld [vmem:[#allocation10 + $0x2c0] sm:$0xff]
    %v753 = vld [vmem:[#allocation10 + $0x2c8] sm:$0xff]
    %v754 = vld [vmem:[#allocation10 + $0x2d0] sm:$0xff]
    %v755 = vld [vmem:[#allocation10 + $0x2d8] sm:$0xff]
    %v756 = vld [vmem:[#allocation10 + $0x2e0] sm:$0xff]
    %v757 = vld [vmem:[#allocation10 + $0x2e8] sm:$0xff]
    %v758 = vld [vmem:[#allocation10 + $0x2f0] sm:$0xff]
    %v759 = vld [vmem:[#allocation10 + $0x2f8] sm:$0xff]
    %v760 = vld [vmem:[#allocation10 + $0x300] sm:$0xff]
    %v761 = vld [vmem:[#allocation10 + $0x308] sm:$0xff]
    %v762 = vld [vmem:[#allocation10 + $0x310] sm:$0xff]
    %v763 = vld [vmem:[#allocation10 + $0x318] sm:$0xff]
    %v764 = vld [vmem:[#allocation10 + $0x320] sm:$0xff]
    %v765 = vld [vmem:[#allocation10 + $0x328] sm:$0xff]
    %v766 = vld [vmem:[#allocation10 + $0x330] sm:$0xff]
    %v767 = vld [vmem:[#allocation10 + $0x338] sm:$0xff]
    %v768 = vld [vmem:[#allocation10 + $0x340] sm:$0xff]
    %v769 = vld [vmem:[#allocation10 + $0x348] sm:$0xff]
    %v770 = vld [vmem:[#allocation10 + $0x350] sm:$0xff]
    %v771 = vld [vmem:[#allocation10 + $0x358] sm:$0xff]
    %v772 = vld [vmem:[#allocation10 + $0x360] sm:$0xff]
    %v773 = vld [vmem:[#allocation10 + $0x368] sm:$0xff]
    %v774 = vld [vmem:[#allocation10 + $0x370] sm:$0xff]
    %v775 = vld [vmem:[#allocation10 + $0x378] sm:$0xff]
    %v776 = vld [vmem:[#allocation10 + $0x380] sm:$0xff]
    %v777 = vld [vmem:[#allocation10 + $0x388] sm:$0xff]
    %v778 = vld [vmem:[#allocation10 + $0x390] sm:$0xff]
    %v779 = vld [vmem:[#allocation10 + $0x398] sm:$0xff]
    %v780 = vld [vmem:[#allocation10 + $0x3a0] sm:$0xff]
    %v781 = vld [vmem:[#allocation10 + $0x3a8] sm:$0xff]
    %v782 = vld [vmem:[#allocation10 + $0x3b0] sm:$0xff]
    %v783 = vld [vmem:[#allocation10 + $0x3b8] sm:$0xff]
    %v784 = vld [vmem:[#allocation10 + $0x3c0] sm:$0xff]
    %v785 = vld [vmem:[#allocation10 + $0x3c8] sm:$0xff]
    %v786 = vld [vmem:[#allocation10 + $0x3d0] sm:$0xff]
    %v787 = vld [vmem:[#allocation10 + $0x3d8] sm:$0xff]
    %v788 = vld [vmem:[#allocation10 + $0x3e0] sm:$0xff]
    %v789 = vld [vmem:[#allocation10 + $0x3e8] sm:$0xff]
    %v790 = vld [vmem:[#allocation10 + $0x3f0] sm:$0xff]
    %v791 = vld [vmem:[#allocation10 + $0x3f8] sm:$0xff]
    %v792 = vld [vmem:[%s10] sm:$0xf]
    %v794 = vlaneseq
    %v795 = vshrl.u32 %v794, 7
    %v796 = vsub.s32 0, %v795
    %v797 = vrot.slane %v792, %v796
    %v798 = vlaneseq
    %v799 = vshrl.u32 %v798, 7
    %v800 = vsub.s32 1, %v799
    %v801 = vrot.slane %v792, %v800
    %v802 = vlaneseq
    %v803 = vshrl.u32 %v802, 7
    %v804 = vsub.s32 2, %v803
    %v805 = vrot.slane %v792, %v804
    %v806 = vlaneseq
    %v807 = vshrl.u32 %v806, 7
    %v808 = vsub.s32 3, %v807
    %v809 = vrot.slane %v792, %v808
    %814 = vmatprep.subr.mxu0 %v665
    %815 = vmatpush1.msra.mxu0 %v664
    %816 = vmatprep.subr.mxu0 %v669
    %817 = vmatpush1.msra.mxu0 %v668
    %818 = vmatprep.subr.mxu0 %v673
    %819 = vmatpush1.msra.mxu0 %v672
    %820 = vmatprep.subr.mxu0 %v677
    %821 = vmatpush1.msra.mxu0 %v676
    %822 = vmatprep.subr.mxu0 %v681
    %823 = vmatpush1.msra.mxu0 %v680
    %824 = vmatprep.subr.mxu0 %v685
    %825 = vmatpush1.msra.mxu0 %v684
    %826 = vmatprep.subr.mxu0 %v689
    %827 = vmatpush1.msra.mxu0 %v688
    %828 = vmatprep.subr.mxu0 %v693
    %829 = vmatpush1.msra.mxu0 %v692
    %830 = vmatprep.subr.mxu0 %v697
    %831 = vmatpush1.msra.mxu0 %v696
    %832 = vmatprep.subr.mxu0 %v701
    %833 = vmatpush1.msra.mxu0 %v700
    %834 = vmatprep.subr.mxu0 %v705
    %835 = vmatpush1.msra.mxu0 %v704
    %836 = vmatprep.subr.mxu0 %v709
    %837 = vmatpush1.msra.mxu0 %v708
    %838 = vmatprep.subr.mxu0 %v713
    %839 = vmatpush1.msra.mxu0 %v712
    %840 = vmatprep.subr.mxu0 %v717
    %841 = vmatpush1.msra.mxu0 %v716
    %842 = vmatprep.subr.mxu0 %v721
    %843 = vmatpush1.msra.mxu0 %v720
    %844 = vmatprep.subr.mxu0 %v725
    %845 = vmatpush1.msra.mxu0 %v724
    %846 = vmatprep.subr.mxu0 %v729
    %847 = vmatpush1.msra.mxu0 %v728
    %848 = vmatprep.subr.mxu0 %v733
    %849 = vmatpush1.msra.mxu0 %v732
    %850 = vmatprep.subr.mxu0 %v737
    %851 = vmatpush1.msra.mxu0 %v736
    %852 = vmatprep.subr.mxu0 %v741
    %853 = vmatpush1.msra.mxu0 %v740
    %854 = vmatprep.subr.mxu0 %v745
    %855 = vmatpush1.msra.mxu0 %v744
    %856 = vmatprep.subr.mxu0 %v749
    %857 = vmatpush1.msra.mxu0 %v748
    %858 = vmatprep.subr.mxu0 %v753
    %859 = vmatpush1.msra.mxu0 %v752
    %860 = vmatprep.subr.mxu0 %v757
    %861 = vmatpush1.msra.mxu0 %v756
    %862 = vmatprep.subr.mxu0 %v761
    %863 = vmatpush1.msra.mxu0 %v760
    %864 = vmatprep.subr.mxu0 %v765
    %865 = vmatpush1.msra.mxu0 %v764
    %866 = vmatprep.subr.mxu0 %v769
    %867 = vmatpush1.msra.mxu0 %v768
    %868 = vmatprep.subr.mxu0 %v773
    %869 = vmatpush1.msra.mxu0 %v772
    %870 = vmatprep.subr.mxu0 %v777
    %871 = vmatpush1.msra.mxu0 %v776
    %872 = vmatprep.subr.mxu0 %v781
    %873 = vmatpush1.msra.mxu0 %v780
    %874 = vmatprep.subr.mxu0 %v785
    %875 = vmatpush1.msra.mxu0 %v784
    %876 = vmatprep.subr.mxu0 %v789
    %877 = vmatpush1.msra.mxu0 %v788
    %878 = vmatprep.mubr.f32.mxu0 %v661
    %879 = vmatmul.mubr.f32.gmra.mrb[0].mxu0 %v660
    %v880 = vpop.f32.mrb[0].mxu0
    %v881 = vadd.f32 %v797, %v880
    %v882 = vpop.f32.mrb[0].mxu0
    %v883 = vadd.f32 %v801, %v882
    %884 = vmatprep.mubr.f32.mxu0 %v663
    %885 = vmatmul.mubr.f32.gmra.mrb[0].mxu0 %v662
    %v886 = vpop.f32.mrb[0].mxu0
    %v887 = vadd.f32 %v797, %v886
    %v888 = vpop.f32.mrb[0].mxu0
    %v889 = vadd.f32 %v801, %v888
    %890 = vdwg.mxu0
    %891 = vmatprep.subr.mxu0 %v667
    %892 = vmatpush1.msra.mxu0 %v666
    %893 = vmatprep.subr.mxu0 %v671
    %894 = vmatpush1.msra.mxu0 %v670
    %895 = vmatprep.subr.mxu0 %v675
    %896 = vmatpush1.msra.mxu0 %v674
    %897 = vmatprep.subr.mxu0 %v679
    %898 = vmatpush1.msra.mxu0 %v678
    %899 = vmatprep.subr.mxu0 %v683
    %900 = vmatpush1.msra.mxu0 %v682
    %901 = vmatprep.subr.mxu0 %v687
    %902 = vmatpush1.msra.mxu0 %v686
    %903 = vmatprep.subr.mxu0 %v691
    %904 = vmatpush1.msra.mxu0 %v690
    %905 = vmatprep.subr.mxu0 %v695
    %906 = vmatpush1.msra.mxu0 %v694
    %907 = vmatprep.subr.mxu0 %v699
    %908 = vmatpush1.msra.mxu0 %v698
    %909 = vmatprep.subr.mxu0 %v703
    %910 = vmatpush1.msra.mxu0 %v702
    %911 = vmatprep.subr.mxu0 %v707
    %912 = vmatpush1.msra.mxu0 %v706
    %913 = vmatprep.subr.mxu0 %v711
    %914 = vmatpush1.msra.mxu0 %v710
    %915 = vmatprep.subr.mxu0 %v715
    %916 = vmatpush1.msra.mxu0 %v714
    %917 = vmatprep.subr.mxu0 %v719
    %918 = vmatpush1.msra.mxu0 %v718
    %919 = vmatprep.subr.mxu0 %v723
    %920 = vmatpush1.msra.mxu0 %v722
    %921 = vmatprep.subr.mxu0 %v727
    %922 = vmatpush1.msra.mxu0 %v726
    %923 = vmatprep.subr.mxu0 %v731
    %924 = vmatpush1.msra.mxu0 %v730
    %925 = vmatprep.subr.mxu0 %v735
    %926 = vmatpush1.msra.mxu0 %v734
    %927 = vmatprep.subr.mxu0 %v739
    %928 = vmatpush1.msra.mxu0 %v738
    %929 = vmatprep.subr.mxu0 %v743
    %930 = vmatpush1.msra.mxu0 %v742
    %931 = vmatprep.subr.mxu0 %v747
    %932 = vmatpush1.msra.mxu0 %v746
    %933 = vmatprep.subr.mxu0 %v751
    %934 = vmatpush1.msra.mxu0 %v750
    %935 = vmatprep.subr.mxu0 %v755
    %936 = vmatpush1.msra.mxu0 %v754
    %937 = vmatprep.subr.mxu0 %v759
    %938 = vmatpush1.msra.mxu0 %v758
    %939 = vmatprep.subr.mxu0 %v763
    %940 = vmatpush1.msra.mxu0 %v762
    %941 = vmatprep.subr.mxu0 %v767
    %942 = vmatpush1.msra.mxu0 %v766
    %943 = vmatprep.subr.mxu0 %v771
    %944 = vmatpush1.msra.mxu0 %v770
    %945 = vmatprep.subr.mxu0 %v775
    %946 = vmatpush1.msra.mxu0 %v774
    %947 = vmatprep.subr.mxu0 %v779
    %948 = vmatpush1.msra.mxu0 %v778
    %949 = vmatprep.subr.mxu0 %v783
    %950 = vmatpush1.msra.mxu0 %v782
    %951 = vmatprep.subr.mxu0 %v787
    %952 = vmatpush1.msra.mxu0 %v786
    %953 = vmatprep.subr.mxu0 %v791
    %954 = vmatpush1.msra.mxu0 %v790
    %955 = vmatprep.mubr.f32.mxu0 %v661
    %956 = vmatmul.mubr.f32.gmra.mrb[0].mxu0 %v660
    %v957 = vpop.f32.mrb[0].mxu0
    %v958 = vadd.f32 %v805, %v957
    %v959 = vpop.f32.mrb[0].mxu0
    %v960 = vadd.f32 %v809, %v959
    %961 = vmatprep.mubr.f32.mxu0 %v663
    %962 = vmatmul.mubr.f32.gmra.mrb[0].mxu0 %v662
    %v963 = vpop.f32.mrb[0].mxu0
    %v964 = vadd.f32 %v805, %v963
    %v965 = vpop.f32.mrb[0].mxu0
    %v966 = vadd.f32 %v809, %v965
    %967 = vdwg.mxu0
    %v968 = vmax.f32 %v881, 0.0
    %v969 = vmax.f32 %v883, 0.0
    %v970 = vmax.f32 %v958, 0.0
    %v971 = vmax.f32 %v960, 0.0
    %v972 = vmax.f32 %v887, 0.0
    %v973 = vmax.f32 %v889, 0.0
    %v974 = vmax.f32 %v964, 0.0
    %v975 = vmax.f32 %v966, 0.0
    %v976 = vld [vmem:[#allocation11] sm:$0xff]
    %v977 = vld [vmem:[#allocation11 + $0x8] sm:$0xff]
    %v978 = vld [vmem:[#allocation11 + $0x10] sm:$0xff]
    %v979 = vld [vmem:[#allocation11 + $0x18] sm:$0xff]
    %v980 = vld [vmem:[#allocation11 + $0x20] sm:$0xff]
    %v981 = vld [vmem:[#allocation11 + $0x28] sm:$0xff]
    %v982 = vld [vmem:[#allocation11 + $0x30] sm:$0xff]
    %v983 = vld [vmem:[#allocation11 + $0x38] sm:$0xff]
    %v984 = vld [vmem:[#allocation11 + $0x40] sm:$0xff]
    %v985 = vld [vmem:[#allocation11 + $0x48] sm:$0xff]
    %v986 = vld [vmem:[#allocation11 + $0x50] sm:$0xff]
    %v987 = vld [vmem:[#allocation11 + $0x58] sm:$0xff]
    %v988 = vld [vmem:[#allocation11 + $0x60] sm:$0xff]
    %v989 = vld [vmem:[#allocation11 + $0x68] sm:$0xff]
    %v990 = vld [vmem:[#allocation11 + $0x70] sm:$0xff]
    %v991 = vld [vmem:[#allocation11 + $0x78] sm:$0xff]
    %v992 = vld [vmem:[#allocation11 + $0x80] sm:$0xff]
    %v993 = vld [vmem:[#allocation11 + $0x88] sm:$0xff]
    %v994 = vld [vmem:[#allocation11 + $0x90] sm:$0xff]
    %v995 = vld [vmem:[#allocation11 + $0x98] sm:$0xff]
    %v996 = vld [vmem:[#allocation11 + $0xa0] sm:$0xff]
    %v997 = vld [vmem:[#allocation11 + $0xa8] sm:$0xff]
    %v998 = vld [vmem:[#allocation11 + $0xb0] sm:$0xff]
    %v999 = vld [vmem:[#allocation11 + $0xb8] sm:$0xff]
    %v1000 = vld [vmem:[#allocation11 + $0xc0] sm:$0xff]
    %v1001 = vld [vmem:[#allocation11 + $0xc8] sm:$0xff]
    %v1002 = vld [vmem:[#allocation11 + $0xd0] sm:$0xff]
    %v1003 = vld [vmem:[#allocation11 + $0xd8] sm:$0xff]
    %v1004 = vld [vmem:[#allocation11 + $0xe0] sm:$0xff]
    %v1005 = vld [vmem:[#allocation11 + $0xe8] sm:$0xff]
    %v1006 = vld [vmem:[#allocation11 + $0xf0] sm:$0xff]
    %v1007 = vld [vmem:[#allocation11 + $0xf8] sm:$0xff]
    %v1008 = vld [vmem:[#allocation11 + $0x100] sm:$0xff]
    %v1009 = vld [vmem:[#allocation11 + $0x108] sm:$0xff]
    %v1010 = vld [vmem:[#allocation11 + $0x110] sm:$0xff]
    %v1011 = vld [vmem:[#allocation11 + $0x118] sm:$0xff]
    %v1012 = vld [vmem:[#allocation11 + $0x120] sm:$0xff]
    %v1013 = vld [vmem:[#allocation11 + $0x128] sm:$0xff]
    %v1014 = vld [vmem:[#allocation11 + $0x130] sm:$0xff]
    %v1015 = vld [vmem:[#allocation11 + $0x138] sm:$0xff]
    %v1016 = vld [vmem:[#allocation11 + $0x140] sm:$0xff]
    %v1017 = vld [vmem:[#allocation11 + $0x148] sm:$0xff]
    %v1018 = vld [vmem:[#allocation11 + $0x150] sm:$0xff]
    %v1019 = vld [vmem:[#allocation11 + $0x158] sm:$0xff]
    %v1020 = vld [vmem:[#allocation11 + $0x160] sm:$0xff]
    %v1021 = vld [vmem:[#allocation11 + $0x168] sm:$0xff]
    %v1022 = vld [vmem:[#allocation11 + $0x170] sm:$0xff]
    %v1023 = vld [vmem:[#allocation11 + $0x178] sm:$0xff]
    %v1024 = vld [vmem:[#allocation11 + $0x180] sm:$0xff]
    %v1025 = vld [vmem:[#allocation11 + $0x188] sm:$0xff]
    %v1026 = vld [vmem:[#allocation11 + $0x190] sm:$0xff]
    %v1027 = vld [vmem:[#allocation11 + $0x198] sm:$0xff]
    %v1028 = vld [vmem:[#allocation11 + $0x1a0] sm:$0xff]
    %v1029 = vld [vmem:[#allocation11 + $0x1a8] sm:$0xff]
    %v1030 = vld [vmem:[#allocation11 + $0x1b0] sm:$0xff]
    %v1031 = vld [vmem:[#allocation11 + $0x1b8] sm:$0xff]
    %v1032 = vld [vmem:[#allocation11 + $0x1c0] sm:$0xff]
    %v1033 = vld [vmem:[#allocation11 + $0x1c8] sm:$0xff]
    %v1034 = vld [vmem:[#allocation11 + $0x1d0] sm:$0xff]
    %v1035 = vld [vmem:[#allocation11 + $0x1d8] sm:$0xff]
    %v1036 = vld [vmem:[#allocation11 + $0x1e0] sm:$0xff]
    %v1037 = vld [vmem:[#allocation11 + $0x1e8] sm:$0xff]
    %v1038 = vld [vmem:[#allocation11 + $0x1f0] sm:$0xff]
    %v1039 = vld [vmem:[#allocation11 + $0x1f8] sm:$0xff]
    %v1040 = vld [vmem:[#allocation11 + $0x200] sm:$0xff]
    %v1041 = vld [vmem:[#allocation11 + $0x208] sm:$0xff]
    %v1042 = vld [vmem:[#allocation11 + $0x210] sm:$0xff]
    %v1043 = vld [vmem:[#allocation11 + $0x218] sm:$0xff]
    %v1044 = vld [vmem:[#allocation11 + $0x220] sm:$0xff]
    %v1045 = vld [vmem:[#allocation11 + $0x228] sm:$0xff]
    %v1046 = vld [vmem:[#allocation11 + $0x230] sm:$0xff]
    %v1047 = vld [vmem:[#allocation11 + $0x238] sm:$0xff]
    %v1048 = vld [vmem:[#allocation11 + $0x240] sm:$0xff]
    %v1049 = vld [vmem:[#allocation11 + $0x248] sm:$0xff]
    %v1050 = vld [vmem:[#allocation11 + $0x250] sm:$0xff]
    %v1051 = vld [vmem:[#allocation11 + $0x258] sm:$0xff]
    %v1052 = vld [vmem:[#allocation11 + $0x260] sm:$0xff]
    %v1053 = vld [vmem:[#allocation11 + $0x268] sm:$0xff]
    %v1054 = vld [vmem:[#allocation11 + $0x270] sm:$0xff]
    %v1055 = vld [vmem:[#allocation11 + $0x278] sm:$0xff]
    %v1056 = vld [vmem:[#allocation11 + $0x280] sm:$0xff]
    %v1057 = vld [vmem:[#allocation11 + $0x288] sm:$0xff]
    %v1058 = vld [vmem:[#allocation11 + $0x290] sm:$0xff]
    %v1059 = vld [vmem:[#allocation11 + $0x298] sm:$0xff]
    %v1060 = vld [vmem:[#allocation11 + $0x2a0] sm:$0xff]
    %v1061 = vld [vmem:[#allocation11 + $0x2a8] sm:$0xff]
    %v1062 = vld [vmem:[#allocation11 + $0x2b0] sm:$0xff]
    %v1063 = vld [vmem:[#allocation11 + $0x2b8] sm:$0xff]
    %v1064 = vld [vmem:[#allocation11 + $0x2c0] sm:$0xff]
    %v1065 = vld [vmem:[#allocation11 + $0x2c8] sm:$0xff]
    %v1066 = vld [vmem:[#allocation11 + $0x2d0] sm:$0xff]
    %v1067 = vld [vmem:[#allocation11 + $0x2d8] sm:$0xff]
    %v1068 = vld [vmem:[#allocation11 + $0x2e0] sm:$0xff]
    %v1069 = vld [vmem:[#allocation11 + $0x2e8] sm:$0xff]
    %v1070 = vld [vmem:[#allocation11 + $0x2f0] sm:$0xff]
    %v1071 = vld [vmem:[#allocation11 + $0x2f8] sm:$0xff]
    %v1072 = vld [vmem:[#allocation11 + $0x300] sm:$0xff]
    %v1073 = vld [vmem:[#allocation11 + $0x308] sm:$0xff]
    %v1074 = vld [vmem:[#allocation11 + $0x310] sm:$0xff]
    %v1075 = vld [vmem:[#allocation11 + $0x318] sm:$0xff]
    %v1076 = vld [vmem:[#allocation11 + $0x320] sm:$0xff]
    %v1077 = vld [vmem:[#allocation11 + $0x328] sm:$0xff]
    %v1078 = vld [vmem:[#allocation11 + $0x330] sm:$0xff]
    %v1079 = vld [vmem:[#allocation11 + $0x338] sm:$0xff]
    %v1080 = vld [vmem:[#allocation11 + $0x340] sm:$0xff]
    %v1081 = vld [vmem:[#allocation11 + $0x348] sm:$0xff]
    %v1082 = vld [vmem:[#allocation11 + $0x350] sm:$0xff]
    %v1083 = vld [vmem:[#allocation11 + $0x358] sm:$0xff]
    %v1084 = vld [vmem:[#allocation11 + $0x360] sm:$0xff]
    %v1085 = vld [vmem:[#allocation11 + $0x368] sm:$0xff]
    %v1086 = vld [vmem:[#allocation11 + $0x370] sm:$0xff]
    %v1087 = vld [vmem:[#allocation11 + $0x378] sm:$0xff]
    %v1088 = vld [vmem:[#allocation11 + $0x380] sm:$0xff]
    %v1089 = vld [vmem:[#allocation11 + $0x388] sm:$0xff]
    %v1090 = vld [vmem:[#allocation11 + $0x390] sm:$0xff]
    %v1091 = vld [vmem:[#allocation11 + $0x398] sm:$0xff]
    %v1092 = vld [vmem:[#allocation11 + $0x3a0] sm:$0xff]
    %v1093 = vld [vmem:[#allocation11 + $0x3a8] sm:$0xff]
    %v1094 = vld [vmem:[#allocation11 + $0x3b0] sm:$0xff]
    %v1095 = vld [vmem:[#allocation11 + $0x3b8] sm:$0xff]
    %v1096 = vld [vmem:[#allocation11 + $0x3c0] sm:$0xff]
    %v1097 = vld [vmem:[#allocation11 + $0x3c8] sm:$0xff]
    %v1098 = vld [vmem:[#allocation11 + $0x3d0] sm:$0xff]
    %v1099 = vld [vmem:[#allocation11 + $0x3d8] sm:$0xff]
    %v1100 = vld [vmem:[#allocation11 + $0x3e0] sm:$0xff]
    %v1101 = vld [vmem:[#allocation11 + $0x3e8] sm:$0xff]
    %v1102 = vld [vmem:[#allocation11 + $0x3f0] sm:$0xff]
    %v1103 = vld [vmem:[#allocation11 + $0x3f8] sm:$0xff]
    %v1104 = vld [vmem:[%s12] sm:$0x3]
    %v1106 = vlaneseq
    %v1107 = vshrl.u32 %v1106, 7
    %v1108 = vsub.s32 0, %v1107
    %v1109 = vrot.slane %v1104, %v1108
    %v1110 = vlaneseq
    %v1111 = vshrl.u32 %v1110, 7
    %v1112 = vsub.s32 1, %v1111
    %v1113 = vrot.slane %v1104, %v1112
    %1116 = vmatprep.subr.mxu0 %v977
    %1117 = vmatpush1.msra.mxu0 %v976
    %1118 = vmatprep.subr.mxu0 %v979
    %1119 = vmatpush1.msra.mxu0 %v978
    %1120 = vmatprep.subr.mxu0 %v981
    %1121 = vmatpush1.msra.mxu0 %v980
    %1122 = vmatprep.subr.mxu0 %v983
    %1123 = vmatpush1.msra.mxu0 %v982
    %1124 = vmatprep.subr.mxu0 %v985
    %1125 = vmatpush1.msra.mxu0 %v984
    %1126 = vmatprep.subr.mxu0 %v987
    %1127 = vmatpush1.msra.mxu0 %v986
    %1128 = vmatprep.subr.mxu0 %v989
    %1129 = vmatpush1.msra.mxu0 %v988
    %1130 = vmatprep.subr.mxu0 %v991
    %1131 = vmatpush1.msra.mxu0 %v990
    %1132 = vmatprep.subr.mxu0 %v993
    %1133 = vmatpush1.msra.mxu0 %v992
    %1134 = vmatprep.subr.mxu0 %v995
    %1135 = vmatpush1.msra.mxu0 %v994
    %1136 = vmatprep.subr.mxu0 %v997
    %1137 = vmatpush1.msra.mxu0 %v996
    %1138 = vmatprep.subr.mxu0 %v999
    %1139 = vmatpush1.msra.mxu0 %v998
    %1140 = vmatprep.subr.mxu0 %v1001
    %1141 = vmatpush1.msra.mxu0 %v1000
    %1142 = vmatprep.subr.mxu0 %v1003
    %1143 = vmatpush1.msra.mxu0 %v1002
    %1144 = vmatprep.subr.mxu0 %v1005
    %1145 = vmatpush1.msra.mxu0 %v1004
    %1146 = vmatprep.subr.mxu0 %v1007
    %1147 = vmatpush1.msra.mxu0 %v1006
    %1148 = vmatprep.subr.mxu0 %v1009
    %1149 = vmatpush1.msra.mxu0 %v1008
    %1150 = vmatprep.subr.mxu0 %v1011
    %1151 = vmatpush1.msra.mxu0 %v1010
    %1152 = vmatprep.subr.mxu0 %v1013
    %1153 = vmatpush1.msra.mxu0 %v1012
    %1154 = vmatprep.subr.mxu0 %v1015
    %1155 = vmatpush1.msra.mxu0 %v1014
    %1156 = vmatprep.subr.mxu0 %v1017
    %1157 = vmatpush1.msra.mxu0 %v1016
    %1158 = vmatprep.subr.mxu0 %v1019
    %1159 = vmatpush1.msra.mxu0 %v1018
    %1160 = vmatprep.subr.mxu0 %v1021
    %1161 = vmatpush1.msra.mxu0 %v1020
    %1162 = vmatprep.subr.mxu0 %v1023
    %1163 = vmatpush1.msra.mxu0 %v1022
    %1164 = vmatprep.subr.mxu0 %v1025
    %1165 = vmatpush1.msra.mxu0 %v1024
    %1166 = vmatprep.subr.mxu0 %v1027
    %1167 = vmatpush1.msra.mxu0 %v1026
    %1168 = vmatprep.subr.mxu0 %v1029
    %1169 = vmatpush1.msra.mxu0 %v1028
    %1170 = vmatprep.subr.mxu0 %v1031
    %1171 = vmatpush1.msra.mxu0 %v1030
    %1172 = vmatprep.subr.mxu0 %v1033
    %1173 = vmatpush1.msra.mxu0 %v1032
    %1174 = vmatprep.subr.mxu0 %v1035
    %1175 = vmatpush1.msra.mxu0 %v1034
    %1176 = vmatprep.subr.mxu0 %v1037
    %1177 = vmatpush1.msra.mxu0 %v1036
    %1178 = vmatprep.subr.mxu0 %v1039
    %1179 = vmatpush1.msra.mxu0 %v1038
    %1180 = vmatprep.mubr.f32.mxu0 %v969
    %1181 = vmatmul.mubr.f32.gmra.mrb[0].mxu0 %v968
    %v1182 = vpop.f32.mrb[0].mxu0
    %v1183 = vadd.f32 %v1109, %v1182
    %v1184 = vpop.f32.mrb[0].mxu0
    %v1185 = vadd.f32 %v1113, %v1184
    %1186 = vmatprep.mubr.f32.mxu0 %v973
    %1187 = vmatmul.mubr.f32.gmra.mrb[0].mxu0 %v972
    %v1188 = vpop.f32.mrb[0].mxu0
    %v1189 = vadd.f32 %v1109, %v1188
    %v1190 = vpop.f32.mrb[0].mxu0
    %v1191 = vadd.f32 %v1113, %v1190
    %1192 = vdwg.mxu0
    %1193 = vmatprep.subr.mxu0 %v1041
    %1194 = vmatpush1.msra.mxu0 %v1040
    %1195 = vmatprep.subr.mxu0 %v1043
    %1196 = vmatpush1.msra.mxu0 %v1042
    %1197 = vmatprep.subr.mxu0 %v1045
    %1198 = vmatpush1.msra.mxu0 %v1044
    %1199 = vmatprep.subr.mxu0 %v1047
    %1200 = vmatpush1.msra.mxu0 %v1046
    %1201 = vmatprep.subr.mxu0 %v1049
    %1202 = vmatpush1.msra.mxu0 %v1048
    %1203 = vmatprep.subr.mxu0 %v1051
    %1204 = vmatpush1.msra.mxu0 %v1050
    %1205 = vmatprep.subr.mxu0 %v1053
    %1206 = vmatpush1.msra.mxu0 %v1052
    %1207 = vmatprep.subr.mxu0 %v1055
    %1208 = vmatpush1.msra.mxu0 %v1054
    %1209 = vmatprep.subr.mxu0 %v1057
    %1210 = vmatpush1.msra.mxu0 %v1056
    %1211 = vmatprep.subr.mxu0 %v1059
    %1212 = vmatpush1.msra.mxu0 %v1058
    %1213 = vmatprep.subr.mxu0 %v1061
    %1214 = vmatpush1.msra.mxu0 %v1060
    %1215 = vmatprep.subr.mxu0 %v1063
    %1216 = vmatpush1.msra.mxu0 %v1062
    %1217 = vmatprep.subr.mxu0 %v1065
    %1218 = vmatpush1.msra.mxu0 %v1064
    %1219 = vmatprep.subr.mxu0 %v1067
    %1220 = vmatpush1.msra.mxu0 %v1066
    %1221 = vmatprep.subr.mxu0 %v1069
    %1222 = vmatpush1.msra.mxu0 %v1068
    %1223 = vmatprep.subr.mxu0 %v1071
    %1224 = vmatpush1.msra.mxu0 %v1070
    %1225 = vmatprep.subr.mxu0 %v1073
    %1226 = vmatpush1.msra.mxu0 %v1072
    %1227 = vmatprep.subr.mxu0 %v1075
    %1228 = vmatpush1.msra.mxu0 %v1074
    %1229 = vmatprep.subr.mxu0 %v1077
    %1230 = vmatpush1.msra.mxu0 %v1076
    %1231 = vmatprep.subr.mxu0 %v1079
    %1232 = vmatpush1.msra.mxu0 %v1078
    %1233 = vmatprep.subr.mxu0 %v1081
    %1234 = vmatpush1.msra.mxu0 %v1080
    %1235 = vmatprep.subr.mxu0 %v1083
    %1236 = vmatpush1.msra.mxu0 %v1082
    %1237 = vmatprep.subr.mxu0 %v1085
    %1238 = vmatpush1.msra.mxu0 %v1084
    %1239 = vmatprep.subr.mxu0 %v1087
    %1240 = vmatpush1.msra.mxu0 %v1086
    %1241 = vmatprep.subr.mxu0 %v1089
    %1242 = vmatpush1.msra.mxu0 %v1088
    %1243 = vmatprep.subr.mxu0 %v1091
    %1244 = vmatpush1.msra.mxu0 %v1090
    %1245 = vmatprep.subr.mxu0 %v1093
    %1246 = vmatpush1.msra.mxu0 %v1092
    %1247 = vmatprep.subr.mxu0 %v1095
    %1248 = vmatpush1.msra.mxu0 %v1094
    %1249 = vmatprep.subr.mxu0 %v1097
    %1250 = vmatpush1.msra.mxu0 %v1096
    %1251 = vmatprep.subr.mxu0 %v1099
    %1252 = vmatpush1.msra.mxu0 %v1098
    %1253 = vmatprep.subr.mxu0 %v1101
    %1254 = vmatpush1.msra.mxu0 %v1100
    %1255 = vmatprep.subr.mxu0 %v1103
    %1256 = vmatpush1.msra.mxu0 %v1102
    %1257 = vmatprep.mubr.f32.mxu0 %v971
    %1258 = vmatmul.mubr.f32.gmra.mrb[0].mxu0 %v970
    %v1259 = vpop.f32.mrb[0].mxu0
    %v1260 = vadd.f32 %v1183, %v1259
    %v1261 = vpop.f32.mrb[0].mxu0
    %v1262 = vadd.f32 %v1185, %v1261
    %1263 = vmatprep.mubr.f32.mxu0 %v975
    %1264 = vmatmul.mubr.f32.gmra.mrb[0].mxu0 %v974
    %v1265 = vpop.f32.mrb[0].mxu0
    %v1266 = vadd.f32 %v1189, %v1265
    %v1267 = vpop.f32.mrb[0].mxu0
    %v1268 = vadd.f32 %v1191, %v1267
    %1269 = vdwg.mxu0
    %v1270 = vadd.f32 %v660, %v1260
    %v1271 = vadd.f32 %v661, %v1262
    %v1272 = vadd.f32 %v662, %v1266
    %v1273 = vadd.f32 %v663, %v1268
    %v1274 = vld [vmem:[%s13] sm:$0x3]
    %v1275 = vld [vmem:[%s14] sm:$0x3]
    %v1276 = vadd.f32 %v1270, %v1271
    %1277 = vadd.xlane.f32.xlu0 %v1276
    %v1278 = vpop.xlane.xlu0 %1277
    %v1279 = vadd.f32 %v1272, %v1273
    %1280 = vadd.xlane.f32.xlu0 %v1279
    %v1281 = vpop.xlane.xlu0 %1280
    %v1282 = vmul.f32 %v1278, %v601
    %v1283 = vmul.f32 %v1281, %v601
    %v1284 = vmul.f32 %v1270, %v1270
    %v1285 = vmul.f32 %v1271, %v1271
    %v1286 = vmul.f32 %v1272, %v1272
    %v1287 = vmul.f32 %v1273, %v1273
    %v1288 = vadd.f32 %v1284, %v1285
    %1289 = vadd.xlane.f32.xlu0 %v1288
    %v1290 = vpop.xlane.xlu0 %1289
    %v1291 = vadd.f32 %v1286, %v1287
    %1292 = vadd.xlane.f32.xlu0 %v1291
    %v1293 = vpop.xlane.xlu0 %1292
    %v1294 = vmul.f32 %v1290, %v601
    %v1295 = vmul.f32 %v1293, %v601
    %v1296 = vmul.f32 %v1282, %v1282
    %v1297 = vmul.f32 %v1283, %v1283
    %v1298 = vsub.f32 %v1294, %v1296
    %v1299 = vsub.f32 %v1295, %v1297
    %v1300 = vmax.f32 %v1298, 0.0
    %v1301 = vmax.f32 %v1299, 0.0
    %v1302 = vsub.f32 %v1270, %v1282
    %v1303 = vsub.f32 %v1271, %v1282
    %v1304 = vsub.f32 %v1272, %v1283
    %v1305 = vsub.f32 %v1273, %v1283
    %v1306 = vadd.f32 %v1300, 1e-05
    %v1307 = vadd.f32 %v1301, 1e-05
    %v1308 = vrsqrt.pop %v1306
    %v1309 = vrsqrt.pop %v1307
    %v1310 = vmul.f32 %v1302, %v1308
    %v1311 = vmul.f32 %v1303, %v1308
    %v1312 = vmul.f32 %v1304, %v1309
    %v1313 = vmul.f32 %v1305, %v1309
    %v1315 = vlaneseq
    %v1316 = vshrl.u32 %v1315, 7
    %v1317 = vsub.s32 0, %v1316
    %v1318 = vrot.slane %v1274, %v1317
    %v1319 = vlaneseq
    %v1320 = vshrl.u32 %v1319, 7
    %v1321 = vsub.s32 1, %v1320
    %v1322 = vrot.slane %v1274, %v1321
    %v1325 = vmul.f32 %v1310, %v1318
    %v1326 = vmul.f32 %v1311, %v1322
    %v1327 = vmul.f32 %v1312, %v1318
    %v1328 = vmul.f32 %v1313, %v1322
    %v1330 = vlaneseq
    %v1331 = vshrl.u32 %v1330, 7
    %v1332 = vsub.s32 0, %v1331
    %v1333 = vrot.slane %v1275, %v1332
    %v1334 = vlaneseq
    %v1335 = vshrl.u32 %v1334, 7
    %v1336 = vsub.s32 1, %v1335
    %v1337 = vrot.slane %v1275, %v1336
    %v1340 = vadd.f32 %v1325, %v1333
    %v1341 = vadd.f32 %v1326, %v1337
    %v1342 = vadd.f32 %v1327, %v1333
    %v1343 = vadd.f32 %v1328, %v1337
    %v1344 = vld [vmem:[#allocation13] sm:$0xff]
    %v1345 = vld [vmem:[#allocation13 + $0x8] sm:$0xff]
    %v1346 = vld [vmem:[#allocation13 + $0x10] sm:$0xff]
    %v1347 = vld [vmem:[#allocation13 + $0x18] sm:$0xff]
    %v1348 = vld [vmem:[#allocation13 + $0x20] sm:$0xff]
    %v1349 = vld [vmem:[#allocation13 + $0x28] sm:$0xff]
    %v1350 = vld [vmem:[#allocation13 + $0x30] sm:$0xff]
    %v1351 = vld [vmem:[#allocation13 + $0x38] sm:$0xff]
    %v1352 = vld [vmem:[#allocation13 + $0x40] sm:$0xff]
    %v1353 = vld [vmem:[#allocation13 + $0x48] sm:$0xff]
    %v1354 = vld [vmem:[#allocation13 + $0x50] sm:$0xff]
    %v1355 = vld [vmem:[#allocation13 + $0x58] sm:$0xff]
    %v1356 = vld [vmem:[#allocation13 + $0x60] sm:$0xff]
    %v1357 = vld [vmem:[#allocation13 + $0x68] sm:$0xff]
    %v1358 = vld [vmem:[#allocation13 + $0x70] sm:$0xff]
    %v1359 = vld [vmem:[#allocation13 + $0x78] sm:$0xff]
    %v1360 = vld [vmem:[#allocation13 + $0x80] sm:$0xff]
    %v1361 = vld [vmem:[#allocation13 + $0x88] sm:$0xff]
    %v1362 = vld [vmem:[#allocation13 + $0x90] sm:$0xff]
    %v1363 = vld [vmem:[#allocation13 + $0x98] sm:$0xff]
    %v1364 = vld [vmem:[#allocation13 + $0xa0] sm:$0xff]
    %v1365 = vld [vmem:[#allocation13 + $0xa8] sm:$0xff]
    %v1366 = vld [vmem:[#allocation13 + $0xb0] sm:$0xff]
    %v1367 = vld [vmem:[#allocation13 + $0xb8] sm:$0xff]
    %v1368 = vld [vmem:[#allocation13 + $0xc0] sm:$0xff]
    %v1369 = vld [vmem:[#allocation13 + $0xc8] sm:$0xff]
    %v1370 = vld [vmem:[#allocation13 + $0xd0] sm:$0xff]
    %v1371 = vld [vmem:[#allocation13 + $0xd8] sm:$0xff]
    %v1372 = vld [vmem:[#allocation13 + $0xe0] sm:$0xff]
    %v1373 = vld [vmem:[#allocation13 + $0xe8] sm:$0xff]
    %v1374 = vld [vmem:[#allocation13 + $0xf0] sm:$0xff]
    %v1375 = vld [vmem:[#allocation13 + $0xf8] sm:$0xff]
    %v1376 = vld [vmem:[%s16] sm:$0x1]
    %v1378 = vlaneseq
    %v1379 = vshrl.u32 %v1378, 7
    %v1380 = vsub.s32 0, %v1379
    %v1381 = vrot.slane %v1376, %v1380
    %1383 = vmatprep.subr.mxu0 0.0
    %1384 = vmatpush1.msra.mxu0 %v1344
    %1385 = vmatprep.subr.mxu0 0.0
    %1386 = vmatpush1.msra.mxu0 %v1345
    %1387 = vmatprep.subr.mxu0 0.0
    %1388 = vmatpush1.msra.mxu0 %v1346
    %1389 = vmatprep.subr.mxu0 0.0
    %1390 = vmatpush1.msra.mxu0 %v1347
    %1391 = vmatprep.subr.mxu0 0.0
    %1392 = vmatpush1.msra.mxu0 %v1348
    %1393 = vmatprep.subr.mxu0 0.0
    %1394 = vmatpush1.msra.mxu0 %v1349
    %1395 = vmatprep.subr.mxu0 0.0
    %1396 = vmatpush1.msra.mxu0 %v1350
    %1397 = vmatprep.subr.mxu0 0.0
    %1398 = vmatpush1.msra.mxu0 %v1351
    %1399 = vmatprep.subr.mxu0 0.0
    %1400 = vmatpush1.msra.mxu0 %v1352
    %1401 = vmatprep.subr.mxu0 0.0
    %1402 = vmatpush1.msra.mxu0 %v1353
    %1403 = vmatprep.subr.mxu0 0.0
    %1404 = vmatpush1.msra.mxu0 %v1354
    %1405 = vmatprep.subr.mxu0 0.0
    %1406 = vmatpush1.msra.mxu0 %v1355
    %1407 = vmatprep.subr.mxu0 0.0
    %1408 = vmatpush1.msra.mxu0 %v1356
    %1409 = vmatprep.subr.mxu0 0.0
    %1410 = vmatpush1.msra.mxu0 %v1357
    %1411 = vmatprep.subr.mxu0 0.0
    %1412 = vmatpush1.msra.mxu0 %v1358
    %1413 = vmatprep.subr.mxu0 0.0
    %1414 = vmatpush1.msra.mxu0 %v1359
    %1415 = vmatprep.subr.mxu0 0.0
    %1416 = vmatpush1.msra.mxu0 %v1360
    %1417 = vmatprep.subr.mxu0 0.0
    %1418 = vmatpush1.msra.mxu0 %v1361
    %1419 = vmatprep.subr.mxu0 0.0
    %1420 = vmatpush1.msra.mxu0 %v1362
    %1421 = vmatprep.subr.mxu0 0.0
    %1422 = vmatpush1.msra.mxu0 %v1363
    %1423 = vmatprep.subr.mxu0 0.0
    %1424 = vmatpush1.msra.mxu0 %v1364
    %1425 = vmatprep.subr.mxu0 0.0
    %1426 = vmatpush1.msra.mxu0 %v1365
    %1427 = vmatprep.subr.mxu0 0.0
    %1428 = vmatpush1.msra.mxu0 %v1366
    %1429 = vmatprep.subr.mxu0 0.0
    %1430 = vmatpush1.msra.mxu0 %v1367
    %1431 = vmatprep.subr.mxu0 0.0
    %1432 = vmatpush1.msra.mxu0 %v1368
    %1433 = vmatprep.subr.mxu0 0.0
    %1434 = vmatpush1.msra.mxu0 %v1369
    %1435 = vmatprep.subr.mxu0 0.0
    %1436 = vmatpush1.msra.mxu0 %v1370
    %1437 = vmatprep.subr.mxu0 0.0
    %1438 = vmatpush1.msra.mxu0 %v1371
    %1439 = vmatprep.subr.mxu0 0.0
    %1440 = vmatpush1.msra.mxu0 %v1372
    %1441 = vmatprep.subr.mxu0 0.0
    %1442 = vmatpush1.msra.mxu0 %v1373
    %1443 = vmatprep.subr.mxu0 0.0
    %1444 = vmatpush1.msra.mxu0 %v1374
    %1445 = vmatprep.subr.mxu0 0.0
    %1446 = vmatpush1.msra.mxu0 %v1375
    %1447 = vmatprep.mubr.f32.mxu0 %v1341
    %1448 = vmatmul.mubr.f32.gmra.mrb[0].mxu0 %v1340
    %v1449 = vpop.f32.mrb[0].mxu0
    %v1450 = vadd.f32 %v1381, %v1449
    %v1451 = vpop.f32.mrb[0].mxu0
    %1452 = vmatprep.mubr.f32.mxu0 %v1343
    %1453 = vmatmul.mubr.f32.gmra.mrb[0].mxu0 %v1342
    %v1454 = vpop.f32.mrb[0].mxu0
    %v1455 = vadd.f32 %v1381, %v1454
    %v1456 = vpop.f32.mrb[0].mxu0
    %1457 = vdwg.mxu0
    %1458 = vst [vmem:[#allocation14] sm:$0xff] %v1450
    %1459 = vst [vmem:[#allocation14 + $0x8] sm:$0xff] %v1455
    // Predicated region
    $region98: #{tpu_custom_call.1} parent=1 // pred_check
      _
    $region99: #{tpu_custom_call.1} parent=1 // pred_check_branch
      %1461 = sbr.rel (0) target = $region101
    $region100: #{tpu_custom_call.1} parent=1 // pred_region
      %s1463 = ssub.s32 256, 256
      %1464 = vsyncadd [#allocation4], %s1463
      %s1465 = sshll.u32 [#allocation14], 4
      %s1466 = int_to_ptr.vmem [resolvable:$true] %s1465
      %1471 = dma.vmem_to_hbm [thread:$0]  %s1466, 256, %s17, [#allocation4], 128, 128, 8
    $region101: #{tpu_custom_call.1} parent=1 // pred_fallthru
      _
    // Predicated region
    $region102: #{tpu_custom_call.1} parent=1 // pred_check
      _
    $region103: #{tpu_custom_call.1} parent=1 // pred_check_branch
      %1473 = sbr.rel (0) target = $region105
    $region104: #{tpu_custom_call.1} parent=1 // pred_region
      %1474 = dma.done [#allocation4], 256
    $region105: #{tpu_custom_call.1} parent=1 // pred_fallthru
      _
    %1475 = vsyncpa [#allocation3], 1
    %1476 = vsyncpa [#allocation6], 1
    %1477 = vsyncpa [#allocation9], 1
    %1478 = vsyncpa [#allocation12], 1
    %1479 = vsyncpa [#allocation4], 1

</llo_original>
